<compile_context>
chip_gen: v7x
topology: tpu7x:2x2x1
jax: 0.10.0
libtpu: 0.0.40
codegen_flags: <defaults>
</compile_context>

<pallas_src>
import functools

import jax
import jax.numpy as jnp
import numpy as np
from jax.experimental import pallas as pl
from jax.experimental.pallas import tpu as pltpu

NEG_INF = -1e30   # finite mask value; masked-softmax guard handles it exactly


# ------------------------------ plain tiled linear ------------------------------
def _matmul_bias_kernel(x_ref, w_ref, b_ref, o_ref, acc_ref):
    @pl.when(pl.program_id(2) == 0)
    def _init():
        acc_ref[...] = jnp.zeros(acc_ref.shape, jnp.float32)

    acc_ref[...] += jnp.dot(x_ref[...], w_ref[...],
                            preferred_element_type=jnp.float32)

    @pl.when(pl.program_id(2) == pl.num_programs(2) - 1)
    def _finalize():
        o_ref[...] = (acc_ref[...] + b_ref[...].astype(jnp.float32)).astype(o_ref.dtype)


def matmul_bias(x, w, b, *, tm=256, tn=256, tk=512):
    """y = x @ w + b, tiled with an f32 VMEM accumulator (bf16-friendly MXU inputs)."""
    M, K = x.shape
    K2, N = w.shape
    assert K == K2
    tm, tn, tk = min(tm, M), min(tn, N), min(tk, K)
    assert M % tm == 0 and N % tn == 0 and K % tk == 0, "pad inputs to tile multiples"
    return pl.pallas_call(
        _matmul_bias_kernel,
        out_shape=jax.ShapeDtypeStruct((M, N), x.dtype),
        grid_spec=pltpu.PrefetchScalarGridSpec(
            num_scalar_prefetch=0,
            grid=(M // tm, N // tn, K // tk),
            in_specs=[
                pl.BlockSpec((tm, tk), lambda i, j, k: (i, k)),
                pl.BlockSpec((tk, tn), lambda i, j, k: (k, j)),
                pl.BlockSpec((1, tn), lambda i, j, k: (0, j)),
            ],
            out_specs=pl.BlockSpec((tm, tn), lambda i, j, k: (i, j)),
            scratch_shapes=[pltpu.VMEM((tm, tn), jnp.float32)],
        ),
        compiler_params=pltpu.CompilerParams(
            dimension_semantics=("parallel", "parallel", "arbitrary"),
            vmem_limit_bytes=48 * 1024 * 1024,
        ),
    )(x, w, b.reshape(1, N))


# --------------------- QKV projection with fused RoPE epilogue ---------------------
def _qkv_rope_kernel(x_ref, w_ref, b_ref, cos_ref, sin_ref, o_ref, acc_ref, *,
                     n_per_slab, head_dim, q_scale):
    j = pl.program_id(1)

    @pl.when(pl.program_id(2) == 0)
    def _init():
        acc_ref[...] = jnp.zeros(acc_ref.shape, jnp.float32)

    acc_ref[...] += jnp.dot(x_ref[...], w_ref[...],
                            preferred_element_type=jnp.float32)

    @pl.when(pl.program_id(2) == pl.num_programs(2) - 1)
    def _finalize():
        y = acc_ref[...] + b_ref[...].astype(jnp.float32)        # (tm, tn) f32
        is_q = j < n_per_slab
        is_k = jnp.logical_and(j >= n_per_slab, j < 2 * n_per_slab)
        is_qk = jnp.logical_or(is_q, is_k)

        @pl.when(is_qk)                                           # q or k column tile
        def _rope():
            cos = cos_ref[...].astype(jnp.float32)
            sin = sin_ref[...].astype(jnp.float32)                # sign-folded sin
            scale = jnp.where(is_q, jnp.float32(q_scale), jnp.float32(1.0))
            half = head_dim // 2
            heads_per_tile = y.shape[1] // head_dim
            for hh in range(heads_per_tile):                      # static, lane-aligned
                sl = slice(hh * head_dim, (hh + 1) * head_dim)
                yh = y[:, sl]
                # rotate_half(x) == roll(x, D/2) with the sign folded into `sin`
                rot = pltpu.roll(yh, shift=half, axis=1)          # XLU lane rotate
                o_ref[:, sl] = ((yh * cos[:, sl] + rot * sin[:, sl]) * scale
                                ).astype(o_ref.dtype)

        @pl.when(jnp.logical_not(is_qk))                          # v column tile
        def _plain():
            o_ref[...] = y.astype(o_ref.dtype)


def qkv_rope_proj(x, w, b, cos_t, sin_t, *, num_heads, head_dim, q_scale,
                  tm=256, tn=256, tk=512):
    """qkv = rope(x @ w + b) for the q/k column slabs (q additionally scaled by
    1/sqrt(D)); the v slab passes through.  cos_t / sin_t are (S, H*D), tiled
    per head, with the rotate_half sign already folded into sin_t."""
    M, K = x.shape
    K2, N = w.shape
    H, D = num_heads, head_dim
    assert K == K2 and N == 3 * H * D
    tm, tk = min(tm, M), min(tk, K)
    tn = min(tn, H * D)
    assert M % tm == 0 and K % tk == 0
    assert (H * D) % tn == 0 and tn % D == 0, "column tile must hold whole heads"
    n_per_slab = (H * D) // tn

    kernel = functools.partial(_qkv_rope_kernel, n_per_slab=n_per_slab,
                               head_dim=D, q_scale=q_scale)

    def cs_col(jj):
        # q blocks -> jj ; k blocks -> jj - n_per_slab ; v blocks reuse the last
        # k block so the (unused) cos/sin copy is deduped across the v region.
        return jnp.minimum(jj, 2 * n_per_slab - 1) % n_per_slab

    return pl.pallas_call(
        kernel,
        out_shape=jax.ShapeDtypeStruct((M, N), x.dtype),
        grid_spec=pltpu.PrefetchScalarGridSpec(
            num_scalar_prefetch=0,
            grid=(M // tm, N // tn, K // tk),
            in_specs=[
                pl.BlockSpec((tm, tk), lambda i, j, k: (i, k)),
                pl.BlockSpec((tk, tn), lambda i, j, k: (k, j)),
                pl.BlockSpec((1, tn), lambda i, j, k: (0, j)),
                pl.BlockSpec((tm, tn), lambda i, j, k: (i, cs_col(j))),   # cos
                pl.BlockSpec((tm, tn), lambda i, j, k: (i, cs_col(j))),   # signed sin
            ],
            out_specs=pl.BlockSpec((tm, tn), lambda i, j, k: (i, j)),
            scratch_shapes=[pltpu.VMEM((tm, tn), jnp.float32)],
        ),
        compiler_params=pltpu.CompilerParams(
            dimension_semantics=("parallel", "parallel", "arbitrary"),
            vmem_limit_bytes=48 * 1024 * 1024,
        ),
    )(x, w, b.reshape(1, N), cos_t, sin_t)


# --------------- varlen (block-diagonal) flash attention kernel ---------------
def _flash_attn_kernel(seg_ref, kvlo_ref, kvhi_ref,
                       q_ref, k_ref, v_ref, qseg_ref, kseg_ref, o_ref,
                       m_sc, l_sc, acc_sc, *, tq, tkv):
    qi = pl.program_id(1)
    ki = pl.program_id(2)

    @pl.when(ki == 0)
    def _init():
        m_sc[...] = jnp.full(m_sc.shape, NEG_INF, jnp.float32)
        l_sc[...] = jnp.zeros(l_sc.shape, jnp.float32)
        acc_sc[...] = jnp.zeros(acc_sc.shape, jnp.float32)

    # Per-q-tile valid kv tile range (the same range the index maps clamp to),
    # so skipped steps do neither MXU work nor fresh K/V DMA.
    kv_lo = kvlo_ref[qi]
    kv_hi = kvhi_ref[qi]
    in_range = jnp.logical_and(ki >= kv_lo, ki <= kv_hi)

    # Fast path when both tiles lie in a single common segment: no mask needed.
    q_lo = seg_ref[qi * tq]
    q_hi = seg_ref[qi * tq + (tq - 1)]
    k_lo = seg_ref[ki * tkv]
    k_hi = seg_ref[ki * tkv + (tkv - 1)]
    single_seg = jnp.logical_and(jnp.logical_and(q_lo == q_hi, k_lo == k_hi),
                                 q_lo == k_lo)

    def online_softmax(s, mask):
        m_prev = m_sc[...]
        m_next = jnp.maximum(m_prev, jnp.max(s, axis=-1, keepdims=True))
        alpha = jnp.exp(m_prev - m_next)
        p = jnp.exp(s - m_next)
        if mask is not None:
            p = jnp.where(mask, p, 0.0)     # robust for fully-masked rows
        l_sc[...] = alpha * l_sc[...] + jnp.sum(p, axis=-1, keepdims=True)
        acc_sc[...] = alpha * acc_sc[...] + jnp.dot(
            p.astype(v_ref.dtype), v_ref[...], preferred_element_type=jnp.float32)
        m_sc[...] = m_next

    def scores():
        # q already carries the 1/sqrt(D) scale (folded in the QKV epilogue).
        return jax.lax.dot_general(q_ref[...], k_ref[...],
                                   (((1,), (1,)), ((), ())),
                                   preferred_element_type=jnp.float32)

    @pl.when(jnp.logical_and(in_range, single_seg))
    def _fast():
        online_softmax(scores(), None)

    @pl.when(jnp.logical_and(in_range, jnp.logical_not(single_seg)))
    def _masked():
        mask = qseg_ref[...] == kseg_ref[...]          # (tq,1)==(1,tkv) -> (tq,tkv)
        s = jnp.where(mask, scores(), NEG_INF)
        online_softmax(s, mask)

    @pl.when(ki == pl.num_programs(2) - 1)
    def _finalize():
        o_ref[...] = (acc_sc[...] *
                      pl.reciprocal(l_sc[...], approx=True)).astype(o_ref.dtype)


def flash_varlen_attention(qkv, seg_ids, cu_seqlens, *, num_heads, head_dim,
                           tq=256, tkv=256):
    """Non-causal varlen attention over the fused qkv slab (S, 3*H*D).
    Output is a lane-dense (S, H*D) slab feeding the output projection."""
    S = qkv.shape[0]
    H, D = num_heads, head_dim
    tq, tkv = min(tq, S), min(tkv, S)
    assert S % tq == 0 and S % tkv == 0, "pad sequence to tile multiples"
    nqt, nkt = S // tq, S // tkv

    q_seg = seg_ids[:, None]                       # (S, 1) int32
    kv_seg = seg_ids[None, :]                      # (1, S) int32

    # Per-q-tile valid kv tile range (block-diagonal mask => contiguous range).
    q_starts = jnp.arange(nqt, dtype=jnp.int32) * tq
    q_lo_seg = seg_ids[q_starts]
    q_hi_seg = seg_ids[q_starts + (tq - 1)]
    kv_lo = (cu_seqlens[q_lo_seg] // tkv).astype(jnp.int32)
    kv_hi = ((cu_seqlens[q_hi_seg + 1] - 1) // tkv).astype(jnp.int32)

    kernel = functools.partial(_flash_attn_kernel, tq=tq, tkv=tkv)
    nbytes = qkv.dtype.itemsize
    cost = pl.CostEstimate(
        flops=4 * H * S * S * D,
        transcendentals=H * S * S,
        # K+V re-streamed per (h, q-tile) plus q read and o write.
        bytes_accessed=(H * nqt * S * D * 2 + 2 * S * H * D) * nbytes)

    def kv_block(ki, qi, lo, hi):
        return jnp.maximum(jnp.minimum(ki, hi[qi]), lo[qi])

    grid_spec = pltpu.PrefetchScalarGridSpec(
        num_scalar_prefetch=3,                     # seg_ids, kv_lo, kv_hi -> SMEM
        grid=(H, nqt, nkt),                        # kv (reduction) axis last
        in_specs=[
            pl.BlockSpec((tq, D), lambda h, qi, ki, seg, lo, hi: (qi, h)),
            pl.BlockSpec((tkv, D),
                         lambda h, qi, ki, seg, lo, hi: (kv_block(ki, qi, lo, hi), H + h)),
            pl.BlockSpec((tkv, D),
                         lambda h, qi, ki, seg, lo, hi: (kv_block(ki, qi, lo, hi), 2 * H + h)),
            pl.BlockSpec((tq, 1), lambda h, qi, ki, seg, lo, hi: (qi, 0)),
            pl.BlockSpec((1, tkv),
                         lambda h, qi, ki, seg, lo, hi: (0, kv_block(ki, qi, lo, hi))),
        ],
        out_specs=pl.BlockSpec((tq, D), lambda h, qi, ki, seg, lo, hi: (qi, h)),
        scratch_shapes=[
            pltpu.VMEM((tq, 1), jnp.float32),      # running max m
            pltpu.VMEM((tq, 1), jnp.float32),      # running sum l
            pltpu.VMEM((tq, D), jnp.float32),      # output accumulator
        ],
    )
    return pl.pallas_call(
        kernel,
        out_shape=jax.ShapeDtypeStruct((S, H * D), qkv.dtype),
        grid_spec=grid_spec,
        compiler_params=pltpu.CompilerParams(
            dimension_semantics=("parallel", "parallel", "arbitrary"),
            vmem_limit_bytes=48 * 1024 * 1024,
        ),
        cost_estimate=cost,
    )(seg_ids, kv_lo, kv_hi, qkv, qkv, qkv, q_seg, kv_seg)


# ---------------------------- full module forward ----------------------------
def qwen2_5_vl_vision_attention(hidden_states, cu_seqlens, rotary_pos_emb, params):
    cos, sin = rotary_pos_emb
    S, dim = hidden_states.shape
    H = params["num_heads"]
    D = dim // H
    # TODO(synk): real Qwen2.5-VL vision uses head_dim=80; this layout assumes
    # head_dim % 128 == 0 lanes, so D=80 needs a padded layout that preserves the
    # shift-by-40 rotate_half semantics (interleave the pad inside each half).

    # rotate_half sign folded into sin; cos/sin tiled per head for the fused epilogue.
    sin_signed = jnp.concatenate([-sin[:, :D // 2], sin[:, D // 2:]], axis=-1)
    cos_t = jnp.tile(cos, (1, H)).astype(hidden_states.dtype)
    sin_t = jnp.tile(sin_signed, (1, H)).astype(hidden_states.dtype)

    qkv = qkv_rope_proj(hidden_states, params["w_qkv"], params["b_qkv"],
                        cos_t, sin_t, num_heads=H, head_dim=D,
                        q_scale=1.0 / (D ** 0.5))                       # (S, 3*dim)

    pos = jnp.arange(S, dtype=jnp.int32)
    seg_ids = (jnp.searchsorted(cu_seqlens, pos, side="right") - 1).astype(jnp.int32)

    attn = flash_varlen_attention(qkv, seg_ids, cu_seqlens,
                                  num_heads=H, head_dim=D)              # (S, dim)
    return matmul_bias(attn, params["w_proj"], params["b_proj"])        # (S, dim)


# ------------------------------- pure-JAX ref -------------------------------
def reference(hidden_states, cu_seqlens, cos, sin, params):
    S, dim = hidden_states.shape
    H = params["num_heads"]
    D = dim // H
    qkv = hidden_states @ params["w_qkv"] + params["b_qkv"]
    q, k, v = jnp.split(qkv, 3, axis=-1)
    q = q.reshape(S, H, D)
    k = k.reshape(S, H, D)
    v = v.reshape(S, H, D)

    def rot_half(x):
        return jnp.concatenate([-x[..., D // 2:], x[..., :D // 2]], axis=-1)

    cb, sb = cos[:, None, :], sin[:, None, :]
    q = q * cb + rot_half(q) * sb
    k = k * cb + rot_half(k) * sb

    pos = jnp.arange(S)
    seg = jnp.searchsorted(cu_seqlens, pos, side="right") - 1
    mask = seg[:, None] == seg[None, :]
    s = jnp.einsum("qhd,khd->hqk", q, k) / (D ** 0.5)
    s = jnp.where(mask[None], s, NEG_INF)
    p = jax.nn.softmax(s, axis=-1)
    o = jnp.einsum("hqk,khd->qhd", p, v).reshape(S, dim)
    return o @ params["w_proj"] + params["b_proj"]


# ------------------------------------ main ------------------------------------
if __name__ == "__main__":
    key = jax.random.PRNGKey(0)
    S, H, D = 512, 2, 128          # seq_len, num_heads, head_dim
    dim = H * D                    # hidden_size = 256

    k1, k2, k3, k4, k5 = jax.random.split(key, 5)
    hidden_f32 = jax.random.normal(k1, (S, dim), dtype=jnp.float32)
    w_qkv_f32 = jax.random.normal(k2, (dim, 3 * dim), jnp.float32) * 0.05
    b_qkv = jax.random.normal(k3, (3 * dim,), jnp.float32) * 0.05
    w_proj_f32 = jax.random.normal(k4, (dim, dim), jnp.float32) * 0.05
    b_proj = jax.random.normal(k5, (dim,), jnp.float32) * 0.05

    # Three packed variable-length sequences: exercises the mask-free fast path
    # (segment 0 fills a whole 256-wide tile), in-tile masking (q tile 1 spans
    # segments 1 and 2) and kv-tile skipping on both sides of the valid range.
    cu_seqlens = jnp.array([0, 256, 352, 512], dtype=jnp.int32)

    # rotary_pos_emb = (cos, sin), each (S, head_dim), rotate_half convention.
    pos = jnp.arange(S, dtype=jnp.float32)
    inv_freq = 1.0 / (10000.0 ** (jnp.arange(0, D // 2, dtype=jnp.float32) * 2.0 / D))
    freqs = pos[:, None] * inv_freq[None, :]
    emb = jnp.concatenate([freqs, freqs], axis=-1)
    cos_f32, sin_f32 = jnp.cos(emb), jnp.sin(emb)

    # bf16 activations / weights / rotary tables (fast MXU path); biases stay f32.
    cd = jnp.bfloat16
    hidden = hidden_f32.astype(cd)
    cos, sin = cos_f32.astype(cd), sin_f32.astype(cd)
    params = {
        "num_heads": H,
        "w_qkv": w_qkv_f32.astype(cd), "b_qkv": b_qkv,
        "w_proj": w_proj_f32.astype(cd), "b_proj": b_proj,
    }

    out = qwen2_5_vl_vision_attention(hidden, cu_seqlens, (cos, sin), params)
    out = jax.block_until_ready(out)

    # f32 reference on the same (bf16-rounded) inputs; tolerance covers the
    # bf16 storage of the qkv / attn slabs and bf16 MXU operands.
    ref_params = {
        "num_heads": H,
        "w_qkv": params["w_qkv"].astype(jnp.float32), "b_qkv": b_qkv,
        "w_proj": params["w_proj"].astype(jnp.float32), "b_proj": b_proj,
    }
    ref = reference(hidden.astype(jnp.float32), cu_seqlens,
                    cos.astype(jnp.float32), sin.astype(jnp.float32), ref_params)

    np.testing.assert_allclose(np.asarray(out.astype(jnp.float32)),
                               np.asarray(ref), rtol=4e-2, atol=4e-2)
    print("KERNEL_OK")
</pallas_src>

<mosaic_0001>
module attributes {stable_mosaic.version = 11 : i64} {
  func.func @_qkv_rope_kernel(%arg0: i32, %arg1: i32, %arg2: i32, %arg3: memref<256x256xbf16, #tpu.memory_space<vmem>>, %arg4: memref<256x256xbf16, #tpu.memory_space<vmem>>, %arg5: memref<1x256xf32, #tpu.memory_space<vmem>>, %arg6: memref<256x256xbf16, #tpu.memory_space<vmem>>, %arg7: memref<256x256xbf16, #tpu.memory_space<vmem>>, %arg8: memref<256x256xbf16, #tpu.memory_space<vmem>>, %arg9: memref<256x256xf32, #tpu.memory_space<vmem>>) attributes {dimension_semantics = [#tpu.dimension_semantics<parallel>, #tpu.dimension_semantics<parallel>, #tpu.dimension_semantics<arbitrary>], iteration_bounds = array<i64: 2, 3, 1>, scalar_prefetch = 0 : i64, scratch_operands = 1 : i64, tpu.core_type = #tpu.core_type<tc>, window_params = [{transform_indices = @transform_0, window_bounds = array<i64: 256, 256>}, {transform_indices = @transform_1, window_bounds = array<i64: 256, 256>}, {transform_indices = @transform_2, window_bounds = array<i64: 1, 256>}, {transform_indices = @transform_3, window_bounds = array<i64: 256, 256>}, {transform_indices = @transform_4, window_bounds = array<i64: 256, 256>}, {transform_indices = @transform_5, window_bounds = array<i64: 256, 256>}]} {
    %c0_i32 = arith.constant 0 : i32
    %0 = arith.cmpi eq, %arg2, %c0_i32 : i32
    %1 = arith.extui %0 : i1 to i32
    %c0_i32_0 = arith.constant 0 : i32
    %2 = arith.cmpi ne, %1, %c0_i32_0 : i32
    scf.if %2 {
      %cst_10 = arith.constant 0.000000e+00 : f32
      %12 = vector.broadcast %cst_10 : f32 to vector<256x256xf32>
      %c0_11 = arith.constant 0 : index
      %c0_12 = arith.constant 0 : index
      %13 = vector.load %arg9[%c0_11, %c0_12] : memref<256x256xf32, #tpu.memory_space<vmem>>, vector<256x256xf32>
      tpu.vector_store %arg9[%c0_11, %c0_12], %12 {strides = array<i32>} : memref<256x256xf32, #tpu.memory_space<vmem>>, vector<256x256xf32>,
    } else {
    }
    %c0 = arith.constant 0 : index
    %c0_1 = arith.constant 0 : index
    %3 = vector.load %arg9[%c0, %c0_1] : memref<256x256xf32, #tpu.memory_space<vmem>>, vector<256x256xf32>
    %c0_2 = arith.constant 0 : index
    %c0_3 = arith.constant 0 : index
    %4 = vector.load %arg3[%c0_2, %c0_3] : memref<256x256xbf16, #tpu.memory_space<vmem>>, vector<256x256xbf16>
    %c0_4 = arith.constant 0 : index
    %c0_5 = arith.constant 0 : index
    %5 = vector.load %arg4[%c0_4, %c0_5] : memref<256x256xbf16, #tpu.memory_space<vmem>>, vector<256x256xbf16>
    %cst = arith.constant dense<0.000000e+00> : vector<256x256xf32>
    %6 = tpu.matmul %4, %5, %cst {dimension_numbers = #tpu.dot_dimension_numbers<[1], [0], [0], [1], [0, 0, 1, 1], [], []>} : vector<256x256xbf16>, vector<256x256xbf16>, vector<256x256xf32> -> vector<256x256xf32>
    %7 = arith.addf %3, %6 : vector<256x256xf32>
    %c0_6 = arith.constant 0 : index
    %c0_7 = arith.constant 0 : index
    %8 = vector.load %arg9[%c0_6, %c0_7] : memref<256x256xf32, #tpu.memory_space<vmem>>, vector<256x256xf32>
    tpu.vector_store %arg9[%c0_6, %c0_7], %7 {strides = array<i32>} : memref<256x256xf32, #tpu.memory_space<vmem>>, vector<256x256xf32>,
    %c0_i32_8 = arith.constant 0 : i32
    %9 = arith.cmpi eq, %arg2, %c0_i32_8 : i32
    %10 = arith.extui %9 : i1 to i32
    %c0_i32_9 = arith.constant 0 : i32
    %11 = arith.cmpi ne, %10, %c0_i32_9 : i32
    scf.if %11 {
      %c0_10 = arith.constant 0 : index
      %c0_11 = arith.constant 0 : index
      %12 = vector.load %arg9[%c0_10, %c0_11] : memref<256x256xf32, #tpu.memory_space<vmem>>, vector<256x256xf32>
      %c0_12 = arith.constant 0 : index
      %c0_13 = arith.constant 0 : index
      %13 = vector.load %arg5[%c0_12, %c0_13] : memref<1x256xf32, #tpu.memory_space<vmem>>, vector<1x256xf32>
      %14 = vector.broadcast %13 : vector<1x256xf32> to vector<256x256xf32>
      %15 = arith.addf %12, %14 : vector<256x256xf32>
      %c1_i32 = arith.constant 1 : i32
      %16 = arith.cmpi slt, %arg1, %c1_i32 : i32
      %c1_i32_14 = arith.constant 1 : i32
      %17 = arith.cmpi sge, %arg1, %c1_i32_14 : i32
      %c2_i32 = arith.constant 2 : i32
      %18 = arith.cmpi slt, %arg1, %c2_i32 : i32
      %19 = arith.andi %17, %18 : i1
      %20 = arith.ori %16, %19 : i1
      %21 = arith.extui %20 : i1 to i32
      %c0_i32_15 = arith.constant 0 : i32
      %22 = arith.cmpi ne, %21, %c0_i32_15 : i32
      scf.if %22 {
        %c0_17 = arith.constant 0 : index
        %c0_18 = arith.constant 0 : index
        %26 = vector.load %arg6[%c0_17, %c0_18] : memref<256x256xbf16, #tpu.memory_space<vmem>>, vector<256x256xbf16>
        %27 = arith.extf %26 : vector<256x256xbf16> to vector<256x256xf32>
        %c0_19 = arith.constant 0 : index
        %c0_20 = arith.constant 0 : index
        %28 = vector.load %arg7[%c0_19, %c0_20] : memref<256x256xbf16, #tpu.memory_space<vmem>>, vector<256x256xbf16>
        %29 = arith.extf %28 : vector<256x256xbf16> to vector<256x256xf32>
        %cst_21 = arith.constant 0.0883883461 : f32
        %cst_22 = arith.constant 1.000000e+00 : f32
        %30 = arith.select %16, %cst_21, %cst_22 : f32
        %31 = vector.extract_strided_slice %15 {offsets = [0, 0], sizes = [256, 128], strides = [1, 1]} : vector<256x256xf32> to vector<256x128xf32>
        %c64_i32 = arith.constant 64 : i32
        %32 = tpu.dynamic_rotate %31 by %c64_i32 dim 1 : vector<256x128xf32>, i32 -> vector<256x128xf32>
        %33 = vector.extract_strided_slice %27 {offsets = [0, 0], sizes = [256, 128], strides = [1, 1]} : vector<256x256xf32> to vector<256x128xf32>
        %34 = arith.mulf %31, %33 : vector<256x128xf32>
        %35 = vector.extract_strided_slice %29 {offsets = [0, 0], sizes = [256, 128], strides = [1, 1]} : vector<256x256xf32> to vector<256x128xf32>
        %36 = arith.mulf %32, %35 : vector<256x128xf32>
        %37 = arith.addf %34, %36 : vector<256x128xf32>
        %38 = vector.broadcast %30 : f32 to vector<256x128xf32>
        %39 = arith.mulf %37, %38 : vector<256x128xf32>
        %40 = arith.truncf %39 : vector<256x128xf32> to vector<256x128xbf16>
        %c0_23 = arith.constant 0 : index
        %c0_24 = arith.constant 0 : index
        %41 = vector.load %arg8[%c0_23, %c0_24] : memref<256x256xbf16, #tpu.memory_space<vmem>>, vector<256x128xbf16>
        tpu.vector_store %arg8[%c0_23, %c0_24], %40 {strides = array<i32>} : memref<256x256xbf16, #tpu.memory_space<vmem>>, vector<256x128xbf16>,
        %42 = vector.extract_strided_slice %15 {offsets = [0, 128], sizes = [256, 128], strides = [1, 1]} : vector<256x256xf32> to vector<256x128xf32>
        %c64_i32_25 = arith.constant 64 : i32
        %43 = tpu.dynamic_rotate %42 by %c64_i32_25 dim 1 : vector<256x128xf32>, i32 -> vector<256x128xf32>
        %44 = vector.extract_strided_slice %27 {offsets = [0, 128], sizes = [256, 128], strides = [1, 1]} : vector<256x256xf32> to vector<256x128xf32>
        %45 = arith.mulf %42, %44 : vector<256x128xf32>
        %46 = vector.extract_strided_slice %29 {offsets = [0, 128], sizes = [256, 128], strides = [1, 1]} : vector<256x256xf32> to vector<256x128xf32>
        %47 = arith.mulf %43, %46 : vector<256x128xf32>
        %48 = arith.addf %45, %47 : vector<256x128xf32>
        %49 = vector.broadcast %30 : f32 to vector<256x128xf32>
        %50 = arith.mulf %48, %49 : vector<256x128xf32>
        %51 = arith.truncf %50 : vector<256x128xf32> to vector<256x128xbf16>
        %c0_26 = arith.constant 0 : index
        %c128 = arith.constant 128 : index
        %52 = vector.load %arg8[%c0_26, %c128] : memref<256x256xbf16, #tpu.memory_space<vmem>>, vector<256x128xbf16>
        tpu.vector_store %arg8[%c0_26, %c128], %51 {strides = array<i32>} : memref<256x256xbf16, #tpu.memory_space<vmem>>, vector<256x128xbf16>,
      } else {
      }
      %true = arith.constant true
      %23 = arith.xori %20, %true : i1
      %24 = arith.extui %23 : i1 to i32
      %c0_i32_16 = arith.constant 0 : i32
      %25 = arith.cmpi ne, %24, %c0_i32_16 : i32
      scf.if %25 {
        %26 = arith.truncf %15 : vector<256x256xf32> to vector<256x256xbf16>
        %c0_17 = arith.constant 0 : index
        %c0_18 = arith.constant 0 : index
        %27 = vector.load %arg8[%c0_17, %c0_18] : memref<256x256xbf16, #tpu.memory_space<vmem>>, vector<256x256xbf16>
        tpu.vector_store %arg8[%c0_17, %c0_18], %26 {strides = array<i32>} : memref<256x256xbf16, #tpu.memory_space<vmem>>, vector<256x256xbf16>,
      } else {
      }
    } else {
    }
    return
  }
  func.func @transform_0(%arg0: i32, %arg1: i32, %arg2: i32) -> (i32, i32) {
    %c0_i32 = arith.constant 0 : i32
    return %arg0, %arg2 : i32, i32
  }
  func.func @transform_1(%arg0: i32, %arg1: i32, %arg2: i32) -> (i32, i32) {
    %c0_i32 = arith.constant 0 : i32
    return %arg2, %arg1 : i32, i32
  }
  func.func @transform_2(%arg0: i32, %arg1: i32, %arg2: i32) -> (i32, i32) {
    %c0_i32 = arith.constant 0 : i32
    %c0_i32_0 = arith.constant 0 : i32
    return %c0_i32, %arg1 : i32, i32
  }
  func.func @transform_3(%arg0: i32, %arg1: i32, %arg2: i32) -> (i32, i32) {
    %c1_i32 = arith.constant 1 : i32
    %0 = arith.minsi %arg1, %c1_i32 : i32
    %c1_i32_0 = arith.constant 1 : i32
    %c0_i32 = arith.constant 0 : i32
    %1 = arith.cmpi eq, %c1_i32_0, %c0_i32 : i32
    %c1_i32_1 = arith.constant 1 : i32
    %2 = arith.select %1, %c1_i32_1, %c1_i32_0 : i32
    %3 = arith.remsi %0, %2 : i32
    %c0_i32_2 = arith.constant 0 : i32
    %4 = arith.cmpi ne, %3, %c0_i32_2 : i32
    %c0_i32_3 = arith.constant 0 : i32
    %5 = arith.cmpi slt, %3, %c0_i32_3 : i32
    %c0_i32_4 = arith.constant 0 : i32
    %6 = arith.cmpi slt, %2, %c0_i32_4 : i32
    %7 = arith.xori %5, %6 : i1
    %8 = arith.andi %7, %4 : i1
    %9 = arith.addi %3, %2 : i32
    %10 = arith.select %8, %9, %3 : i32
    %c0_i32_5 = arith.constant 0 : i32
    return %arg0, %10 : i32, i32
  }
  func.func @transform_4(%arg0: i32, %arg1: i32, %arg2: i32) -> (i32, i32) {
    %c1_i32 = arith.constant 1 : i32
    %0 = arith.minsi %arg1, %c1_i32 : i32
    %c1_i32_0 = arith.constant 1 : i32
    %c0_i32 = arith.constant 0 : i32
    %1 = arith.cmpi eq, %c1_i32_0, %c0_i32 : i32
    %c1_i32_1 = arith.constant 1 : i32
    %2 = arith.select %1, %c1_i32_1, %c1_i32_0 : i32
    %3 = arith.remsi %0, %2 : i32
    %c0_i32_2 = arith.constant 0 : i32
    %4 = arith.cmpi ne, %3, %c0_i32_2 : i32
    %c0_i32_3 = arith.constant 0 : i32
    %5 = arith.cmpi slt, %3, %c0_i32_3 : i32
    %c0_i32_4 = arith.constant 0 : i32
    %6 = arith.cmpi slt, %2, %c0_i32_4 : i32
    %7 = arith.xori %5, %6 : i1
    %8 = arith.andi %7, %4 : i1
    %9 = arith.addi %3, %2 : i32
    %10 = arith.select %8, %9, %3 : i32
    %c0_i32_5 = arith.constant 0 : i32
    return %arg0, %10 : i32, i32
  }
  func.func @transform_5(%arg0: i32, %arg1: i32, %arg2: i32) -> (i32, i32) {
    %c0_i32 = arith.constant 0 : i32
    return %arg0, %arg1 : i32, i32
  }
}

</mosaic_0001>

<llo_original>
// kernel: tpu_custom_call.1
$region0: #{tpu_custom_call.1}
  #allocation0 [shape = 'u32[]', space=smem, size = 0x4, offset = 0x4, fixed_abs, tag = 'smem constant byte address 0x4 - core index']
  #allocation1 [shape = 'u32[144,128]{1,0:T(1,128)}', space=vmem, size = 0x12000, scoped, tag = 'internal scratch']
  #allocation2 [shape = 'f32[256,256]{1,0:T(8,128)}', space=vmem, size = 0x40000, scoped, tag = 'scratch operand']
  %s0 = inlined_call_operand.hbm [shape: bf16[512,256], index: 0, kind: input, shape index: {}]
  %s1 = inlined_call_operand.hbm [shape: bf16[256,768], index: 1, kind: input, shape index: {}]
  %s2 = inlined_call_operand.vmem [shape: f32[1,768], index: 2, kind: input, shape index: {}]
  %s3 = inlined_call_operand.hbm [shape: bf16[512,256], index: 3, kind: input, shape index: {}]
  %s4 = inlined_call_operand.hbm [shape: bf16[512,256], index: 4, kind: input, shape index: {}]
  %s5 = inlined_call_operand.hbm [shape: bf16[512,768], index: 5, kind: output, shape index: {}]
  %s6 = sld [smem:[#allocation0]]
  $region85: #{tpu_custom_call.1} parent=0
    _
  %s8 = ssub.s32 1, %s6
  %s9 = scalar_select 0, %s8, %s6
  $region1: #{tpu_custom_call.1} parent=0
    #allocation3 [shape = 'u8[262144]{0}', space=vmem, size = 0x40000, scoped, tag = 'input window, operand 0']
    #allocation4 [shape = 's32[2]{0}', space=sflag, size = 0x8, scoped, tag = 'scoped memory for tpu_custom_call.1']
    #allocation5 [shape = 's32[2]{0}', space=sflag, size = 0x8, scoped, tag = 'scoped memory for tpu_custom_call.1']
    #allocation6 [shape = 'u8[262144]{0}', space=vmem, size = 0x40000, scoped, tag = 'input window, operand 1']
    #allocation7 [shape = 's32[2]{0}', space=sflag, size = 0x8, scoped, tag = 'scoped memory for tpu_custom_call.1']
    #allocation8 [shape = 'u8[262144]{0}', space=vmem, size = 0x40000, scoped, tag = 'input window, operand 3']
    #allocation9 [shape = 'u8[262144]{0}', space=vmem, size = 0x40000, scoped, tag = 'input window, operand 4']
    #allocation10 [shape = 's32[2]{0}', space=sflag, size = 0x8, scoped, tag = 'scoped memory for tpu_custom_call.1']
    #allocation11 [shape = 'u8[262144]{0}', space=vmem, size = 0x40000, scoped, tag = 'output window, operand 0']
    %10 = vsyncpa [#allocation4], 0
    %s11 = scalar_lea.sflag [#allocation4], 1
    %12 = vsyncpa %s11, 0
    %13 = vsyncpa [#allocation7], 0
    %s14 = scalar_lea.sflag [#allocation7], 1
    %15 = vsyncpa %s14, 0
    %16 = vsyncpa [#allocation10], 0
    %s17 = scalar_lea.sflag [#allocation10], 1
    %18 = vsyncpa %s17, 0
    %19 = vsyncpa [#allocation5], 0
    %s20 = scalar_lea.sflag [#allocation5], 1
    %21 = vsyncpa %s20, 0
    loop: start=0, step=1, limit=8
    $region2: #{tpu_custom_call.1} parent=1 // loop_pre_header
      _
    $region3: #{tpu_custom_call.1} parent=1 // loop_header
      %s23 = sphi 0, %s27
      %p24 = scmp.ge.s32.totalorder %s23, 8
      %s30 = sphi 0, %s49
      %s31 = sphi 0, %s45
      %s32 = sphi 0, %s41
      %s33 = sphi 0, %s30
      %s34 = sphi 0, %s31
      %s35 = sphi 0, %s32
      %s36 = sphi 0, %s33
      %s37 = sphi 0, %s34
      %s38 = sphi 0, %s35
      %s54 = sphi 0, %s56
      %s57 = sphi 0, %s54
      %s58 = sphi 0, %s57
      %s74 = sphi 0, %s58
      %s82 = sphi 0, %s84
      %s85 = sphi 0, %s82
      %s86 = sphi 0, %s85
      %s102 = sphi 0, %s86
      %s108 = sphi 0, %s110
      %s111 = sphi 0, %s108
      %s112 = sphi 0, %s111
      %s128 = sphi 0, %s112
      %s134 = sphi 0, %s136
      %s137 = sphi 0, %s134
      %s138 = sphi 0, %s137
      %s154 = sphi 0, %s138
      %s160 = sphi 0, %s162
      %s163 = sphi 0, %s160
      %s164 = sphi 0, %s163
      %s180 = sphi 0, %s164
      %s188 = sphi 0, %s190
      %s191 = sphi 0, %s188
      %s192 = sphi 0, %s191
      %s208 = sphi 0, %s192
    $region4: #{tpu_custom_call.1} parent=1 // loop_header_branch
      %26 = sbr.rel (%p24) target = $region8
    $region5: #{tpu_custom_call.1} parent=1 // loop_body
      %s28 = ssub.s32 %s23, 1
      %s29 = ssub.s32 %s23, 2
      %s39 = sadd.s32 1, %s32
      %p40 = scmp.ge.s32.totalorder %s39, 1
      %s41 = scalar_select %p40, 0, %s39
      %s42 = sadd.s32 1, %s31
      %s43 = scalar_select %p40, %s42, %s31
      %p44 = scmp.ge.s32.totalorder %s43, 3
      %s45 = scalar_select %p44, 0, %s43
      %s46 = sadd.s32 1, %s30
      %s47 = scalar_select %p44, %s46, %s30
      %p48 = scmp.ge.s32.totalorder %s47, 2
      %s49 = scalar_select %p48, 0, %s47
      %s50 = ssub.s32 %s30, %s49
      %s51 = ssub.s32 %s32, %s41
      %s52 = sor.u32 %s50, %s51
      %p53 = scmp.eq.s32.totalorder %s52, 0
      %s55 = sadd.s32 %s54, 1
      %s56 = scalar_select %p53, %s54, %s55
      %p59 = pneg %p53
      %p60 = scmp.eq.s32.totalorder %s23, 5
      %p61 = por %p59, %p60
      %p62 = scmp.ne.s32.totalorder %s54, %s57
      %p63 = scmp.eq.s32.totalorder %s23, 0
      %p64 = por %p62, %p63
      %p65 = scmp.ne.s32.totalorder %s54, %s57
      %p66 = scmp.eq.s32.totalorder %s28, 5
      %p67 = por %p65, %p66
      %p68 = scmp.ne.s32.totalorder %s57, %s58
      %p69 = scmp.eq.s32.totalorder %s28, 0
      %p70 = por %p68, %p69
      %p71 = scmp.ne.s32.totalorder %s57, %s58
      %p72 = scmp.eq.s32.totalorder %s29, 5
      %p73 = por %p71, %p72
      %p75 = scmp.ne.s32.totalorder %s58, %s74
      %p76 = scmp.eq.s32.totalorder %s29, 0
      %p77 = por %p75, %p76
      %s78 = ssub.s32 %s32, %s41
      %s79 = ssub.s32 %s31, %s45
      %s80 = sor.u32 %s78, %s79
      %p81 = scmp.eq.s32.totalorder %s80, 0
      %s83 = sadd.s32 %s82, 1
      %s84 = scalar_select %p81, %s82, %s83
      %p87 = pneg %p81
      %p88 = scmp.eq.s32.totalorder %s23, 5
      %p89 = por %p87, %p88
      %p90 = scmp.ne.s32.totalorder %s82, %s85
      %p91 = scmp.eq.s32.totalorder %s23, 0
      %p92 = por %p90, %p91
      %p93 = scmp.ne.s32.totalorder %s82, %s85
      %p94 = scmp.eq.s32.totalorder %s28, 5
      %p95 = por %p93, %p94
      %p96 = scmp.ne.s32.totalorder %s85, %s86
      %p97 = scmp.eq.s32.totalorder %s28, 0
      %p98 = por %p96, %p97
      %p99 = scmp.ne.s32.totalorder %s85, %s86
      %p100 = scmp.eq.s32.totalorder %s29, 5
      %p101 = por %p99, %p100
      %p103 = scmp.ne.s32.totalorder %s86, %s102
      %p104 = scmp.eq.s32.totalorder %s29, 0
      %p105 = por %p103, %p104
      %s106 = ssub.s32 %s31, %s45
      %p107 = scmp.eq.s32.totalorder %s106, 0
      %s109 = sadd.s32 %s108, 1
      %s110 = scalar_select %p107, %s108, %s109
      %p113 = pneg %p107
      %p114 = scmp.eq.s32.totalorder %s23, 5
      %p115 = por %p113, %p114
      %p116 = scmp.ne.s32.totalorder %s108, %s111
      %p117 = scmp.eq.s32.totalorder %s23, 0
      %p118 = por %p116, %p117
      %p119 = scmp.ne.s32.totalorder %s108, %s111
      %p120 = scmp.eq.s32.totalorder %s28, 5
      %p121 = por %p119, %p120
      %p122 = scmp.ne.s32.totalorder %s111, %s112
      %p123 = scmp.eq.s32.totalorder %s28, 0
      %p124 = por %p122, %p123
      %p125 = scmp.ne.s32.totalorder %s111, %s112
      %p126 = scmp.eq.s32.totalorder %s29, 5
      %p127 = por %p125, %p126
      %p129 = scmp.ne.s32.totalorder %s112, %s128
      %p130 = scmp.eq.s32.totalorder %s29, 0
      %p131 = por %p129, %p130
      %s132 = ssub.s32 %s30, %s49
      %p133 = scmp.eq.s32.totalorder %s132, 0
      %s135 = sadd.s32 %s134, 1
      %s136 = scalar_select %p133, %s134, %s135
      %p139 = pneg %p133
      %p140 = scmp.eq.s32.totalorder %s23, 5
      %p141 = por %p139, %p140
      %p142 = scmp.ne.s32.totalorder %s134, %s137
      %p143 = scmp.eq.s32.totalorder %s23, 0
      %p144 = por %p142, %p143
      %p145 = scmp.ne.s32.totalorder %s134, %s137
      %p146 = scmp.eq.s32.totalorder %s28, 5
      %p147 = por %p145, %p146
      %p148 = scmp.ne.s32.totalorder %s137, %s138
      %p149 = scmp.eq.s32.totalorder %s28, 0
      %p150 = por %p148, %p149
      %p151 = scmp.ne.s32.totalorder %s137, %s138
      %p152 = scmp.eq.s32.totalorder %s29, 5
      %p153 = por %p151, %p152
      %p155 = scmp.ne.s32.totalorder %s138, %s154
      %p156 = scmp.eq.s32.totalorder %s29, 0
      %p157 = por %p155, %p156
      %s158 = ssub.s32 %s30, %s49
      %p159 = scmp.eq.s32.totalorder %s158, 0
      %s161 = sadd.s32 %s160, 1
      %s162 = scalar_select %p159, %s160, %s161
      %p165 = pneg %p159
      %p166 = scmp.eq.s32.totalorder %s23, 5
      %p167 = por %p165, %p166
      %p168 = scmp.ne.s32.totalorder %s160, %s163
      %p169 = scmp.eq.s32.totalorder %s23, 0
      %p170 = por %p168, %p169
      %p171 = scmp.ne.s32.totalorder %s160, %s163
      %p172 = scmp.eq.s32.totalorder %s28, 5
      %p173 = por %p171, %p172
      %p174 = scmp.ne.s32.totalorder %s163, %s164
      %p175 = scmp.eq.s32.totalorder %s28, 0
      %p176 = por %p174, %p175
      %p177 = scmp.ne.s32.totalorder %s163, %s164
      %p178 = scmp.eq.s32.totalorder %s29, 5
      %p179 = por %p177, %p178
      %p181 = scmp.ne.s32.totalorder %s164, %s180
      %p182 = scmp.eq.s32.totalorder %s29, 0
      %p183 = por %p181, %p182
      %s184 = ssub.s32 %s30, %s49
      %s185 = ssub.s32 %s31, %s45
      %s186 = sor.u32 %s184, %s185
      %p187 = scmp.eq.s32.totalorder %s186, 0
      %s189 = sadd.s32 %s188, 1
      %s190 = scalar_select %p187, %s188, %s189
      %p193 = pneg %p187
      %p194 = scmp.eq.s32.totalorder %s23, 5
      %p195 = por %p193, %p194
      %p196 = scmp.ne.s32.totalorder %s188, %s191
      %p197 = scmp.eq.s32.totalorder %s23, 0
      %p198 = por %p196, %p197
      %p199 = scmp.ne.s32.totalorder %s188, %s191
      %p200 = scmp.eq.s32.totalorder %s28, 5
      %p201 = por %p199, %p200
      %p202 = scmp.ne.s32.totalorder %s191, %s192
      %p203 = scmp.eq.s32.totalorder %s28, 0
      %p204 = por %p202, %p203
      %p205 = scmp.ne.s32.totalorder %s191, %s192
      %p206 = scmp.eq.s32.totalorder %s29, 5
      %p207 = por %p205, %p206
      %p209 = scmp.ne.s32.totalorder %s192, %s208
      %p210 = scmp.eq.s32.totalorder %s29, 0
      %p211 = por %p209, %p210
      %p212 = scmp.le.s32.totalorder 1, %s23
      %p213 = scmp.lt.s32.totalorder %s23, 7
      %p214 = pnand %p212, %p213
      %p215 = pneg %p214
      // Predicated region
      $region9: #{tpu_custom_call.1} parent=5 // pred_check
        _
      $region10: #{tpu_custom_call.1} parent=5 // pred_check_branch
        %217 = sbr.rel (%p214) target = $region12
      $region11: #{tpu_custom_call.1} parent=5 // pred_region
        %s218 = ssub.s32 %s23, 1
      $region12: #{tpu_custom_call.1} parent=5 // pred_fallthru
        _
      %p219 = scmp.lt.s32.totalorder %s23, 6
      // Predicated region
      $region13: #{tpu_custom_call.1} parent=5 // pred_check
        %p220 = pneg %p219
      $region14: #{tpu_custom_call.1} parent=5 // pred_check_branch
        %222 = sbr.rel (%p220) target = $region16
      $region15: #{tpu_custom_call.1} parent=5 // pred_region
        // Predicated region
        $region17: #{tpu_custom_call.1} parent=15 // pred_check
          %p223 = pneg %p64
        $region18: #{tpu_custom_call.1} parent=15 // pred_check_branch
          %225 = sbr.rel (%p223) target = $region20
        $region19: #{tpu_custom_call.1} parent=15 // pred_region
          %s226 = sand.u32 %s54, 1
          %s227 = scalar_lea.sflag [#allocation4], %s226
          %s228 = sand.u32 %s54, 1
          %s229 = smul.addr %s228, 256
          %s230 = scalar_lea.vmem [#allocation3], %s229
          %s231 = smul.u32 32, %s30
          %s232 = smul.u32 2, %s32
          %s234 = ssub.s32 4096, 4096
          %235 = vsyncadd %s227, %s234
          %s236 = smul.addr %s231, 2
          %s237 = sadd.s32 %s232, %s236
          %s238 = smul.addr %s237, 64
          %s239 = scalar_lea.hbm %s0, %s238
          %s240 = sshll.u32 %s230, 4
          %s241 = int_to_ptr.vmem [resolvable:$true] %s240
          %246 = dma.hbm_to_vmem [thread:$0]  %s239, 4096, %s241, %s227, 128, 128, 8
        $region20: #{tpu_custom_call.1} parent=15 // pred_fallthru
          _
        // Predicated region
        $region21: #{tpu_custom_call.1} parent=15 // pred_check
          %p247 = pneg %p92
        $region22: #{tpu_custom_call.1} parent=15 // pred_check_branch
          %249 = sbr.rel (%p247) target = $region24
        $region23: #{tpu_custom_call.1} parent=15 // pred_region
          %s250 = sand.u32 %s23, 1
          %s251 = scalar_lea.sflag [#allocation7], %s250
          %s252 = sand.u32 %s82, 1
          %s253 = smul.addr %s252, 256
          %s254 = scalar_lea.vmem [#allocation6], %s253
          %s255 = smul.u32 32, %s32
          %s256 = smul.u32 2, %s31
          %s258 = ssub.s32 4096, 4096
          %259 = vsyncadd %s251, %s258
          %s260 = smul.addr %s255, 6
          %s261 = sadd.s32 %s256, %s260
          %s262 = smul.addr %s261, 64
          %s263 = scalar_lea.hbm %s1, %s262
          %s264 = sshll.u32 %s254, 4
          %s265 = int_to_ptr.vmem [resolvable:$true] %s264
          %270 = dma.hbm_to_vmem [thread:$0]  %s263, 4096, %s265, %s251, 384, 128, 8
        $region24: #{tpu_custom_call.1} parent=15 // pred_fallthru
          _
        // Predicated region
        $region25: #{tpu_custom_call.1} parent=15 // pred_check
          %p271 = pneg %p118
        $region26: #{tpu_custom_call.1} parent=15 // pred_check_branch
          %273 = sbr.rel (%p271) target = $region28
        $region27: #{tpu_custom_call.1} parent=15 // pred_region
          %s274 = smul.u32 2, %s31
          %p275 = scmp.lt.s32.totalorder %s274, 5
          %s276 = scalar_select %p275, %s274, 5
          %s277 = scalar_lea.vmem %s2, %s276
          %s278 = smul.u32 2, %s31
        $region28: #{tpu_custom_call.1} parent=15 // pred_fallthru
          _
        // Predicated region
        $region29: #{tpu_custom_call.1} parent=15 // pred_check
          %p279 = pneg %p144
        $region30: #{tpu_custom_call.1} parent=15 // pred_check_branch
          %281 = sbr.rel (%p279) target = $region32
        $region31: #{tpu_custom_call.1} parent=15 // pred_region
          %s282 = sand.u32 %s23, 1
          %s283 = scalar_lea.sflag [#allocation7], %s282
          %s284 = sand.u32 %s134, 1
          %s285 = smul.addr %s284, 256
          %s286 = scalar_lea.vmem [#allocation8], %s285
          %s287 = smul.u32 32, %s30
          %s289 = ssub.s32 4096, 4096
          %290 = vsyncadd %s283, %s289
          %s291 = smul.addr %s287, 2
          %s292 = smul.addr %s291, 64
          %s293 = scalar_lea.hbm %s3, %s292
          %s294 = sshll.u32 %s286, 4
          %s295 = int_to_ptr.vmem [resolvable:$true] %s294
          %300 = dma.hbm_to_vmem [thread:$0]  %s293, 4096, %s295, %s283, 128, 128, 8
        $region32: #{tpu_custom_call.1} parent=15 // pred_fallthru
          _
        // Predicated region
        $region33: #{tpu_custom_call.1} parent=15 // pred_check
          %p301 = pneg %p170
        $region34: #{tpu_custom_call.1} parent=15 // pred_check_branch
          %303 = sbr.rel (%p301) target = $region36
        $region35: #{tpu_custom_call.1} parent=15 // pred_region
          %s304 = sand.u32 %s160, 1
          %s305 = scalar_lea.sflag [#allocation10], %s304
          %s306 = sand.u32 %s160, 1
          %s307 = smul.addr %s306, 256
          %s308 = scalar_lea.vmem [#allocation9], %s307
          %s309 = smul.u32 32, %s30
          %s311 = ssub.s32 4096, 4096
          %312 = vsyncadd %s305, %s311
          %s313 = smul.addr %s309, 2
          %s314 = smul.addr %s313, 64
          %s315 = scalar_lea.hbm %s4, %s314
          %s316 = sshll.u32 %s308, 4
          %s317 = int_to_ptr.vmem [resolvable:$true] %s316
          %322 = dma.hbm_to_vmem [thread:$0]  %s315, 4096, %s317, %s305, 128, 128, 8
        $region36: #{tpu_custom_call.1} parent=15 // pred_fallthru
          _
      $region16: #{tpu_custom_call.1} parent=5 // pred_fallthru
        _
      %p323 = scmp.le.s32.totalorder 1, %s23
      %p324 = scmp.lt.s32.totalorder %s23, 7
      %p325 = pnand %p323, %p324
      %p326 = pneg %p325
      // Predicated region
      $region37: #{tpu_custom_call.1} parent=5 // pred_check
        _
      $region38: #{tpu_custom_call.1} parent=5 // pred_check_branch
        %328 = sbr.rel (%p325) target = $region40
      $region39: #{tpu_custom_call.1} parent=5 // pred_region
        %s329 = ssub.s32 %s23, 1
        %s330 = sand.u32 %s57, 1
        %s331 = scalar_lea.sflag [#allocation4], %s330
        %s332 = sand.u32 %s57, 1
        %s333 = smul.addr %s332, 256
        %s334 = scalar_lea.vmem [#allocation3], %s333
        // Predicated region
        $region41: #{tpu_custom_call.1} parent=39 // pred_check
          %p335 = pneg %p70
        $region42: #{tpu_custom_call.1} parent=39 // pred_check_branch
          %337 = sbr.rel (%p335) target = $region44
        $region43: #{tpu_custom_call.1} parent=39 // pred_region
          %338 = dma.done %s331, 4096
        $region44: #{tpu_custom_call.1} parent=39 // pred_fallthru
          _
        %s339 = sand.u32 %s28, 1
        %s340 = scalar_lea.sflag [#allocation7], %s339
        %s341 = sand.u32 %s85, 1
        %s342 = smul.addr %s341, 256
        %s343 = scalar_lea.vmem [#allocation6], %s342
        // Predicated region
        $region45: #{tpu_custom_call.1} parent=39 // pred_check
          %p344 = pneg %p98
        $region46: #{tpu_custom_call.1} parent=39 // pred_check_branch
          %346 = sbr.rel (%p344) target = $region48
        $region47: #{tpu_custom_call.1} parent=39 // pred_region
          %347 = dma.done %s340, 4096
        $region48: #{tpu_custom_call.1} parent=39 // pred_fallthru
          _
        %s348 = sand.u32 %s28, 1
        %s349 = scalar_lea.sflag [#allocation7], %s348
        %s350 = sand.u32 %s137, 1
        %s351 = smul.addr %s350, 256
        %s352 = scalar_lea.vmem [#allocation8], %s351
        // Predicated region
        $region49: #{tpu_custom_call.1} parent=39 // pred_check
          %p353 = pneg %p150
        $region50: #{tpu_custom_call.1} parent=39 // pred_check_branch
          %355 = sbr.rel (%p353) target = $region52
        $region51: #{tpu_custom_call.1} parent=39 // pred_region
          %356 = dma.done %s349, 4096
        $region52: #{tpu_custom_call.1} parent=39 // pred_fallthru
          _
        %s357 = sand.u32 %s163, 1
        %s358 = scalar_lea.sflag [#allocation10], %s357
        %s359 = sand.u32 %s163, 1
        %s360 = smul.addr %s359, 256
        %s361 = scalar_lea.vmem [#allocation9], %s360
        // Predicated region
        $region53: #{tpu_custom_call.1} parent=39 // pred_check
          %p362 = pneg %p176
        $region54: #{tpu_custom_call.1} parent=39 // pred_check_branch
          %364 = sbr.rel (%p362) target = $region56
        $region55: #{tpu_custom_call.1} parent=39 // pred_region
          %365 = dma.done %s358, 4096
        $region56: #{tpu_custom_call.1} parent=39 // pred_fallthru
          _
        %s366 = sand.u32 %s57, 1
        %s367 = scalar_lea.sflag [#allocation4], %s366
        %s368 = sand.u32 %s57, 1
        %s369 = smul.addr %s368, 256
        %s370 = scalar_lea.vmem [#allocation3], %s369
        %p371 = pneg %p70
        %p372 = pneg %p67
        %s373 = sand.u32 %s28, 1
        %s374 = scalar_lea.sflag [#allocation7], %s373
        %s375 = sand.u32 %s85, 1
        %s376 = smul.addr %s375, 256
        %s377 = scalar_lea.vmem [#allocation6], %s376
        %p378 = pneg %p98
        %p379 = pneg %p95
        %s380 = smul.u32 2, %s34
        %p381 = scmp.lt.s32.totalorder %s380, 5
        %s382 = scalar_select %p381, %s380, 5
        %s383 = scalar_lea.vmem %s2, %s382
        %p384 = pneg %p124
        %p385 = pneg %p121
        %s386 = sand.u32 %s28, 1
        %s387 = scalar_lea.sflag [#allocation7], %s386
        %s388 = sand.u32 %s137, 1
        %s389 = smul.addr %s388, 256
        %s390 = scalar_lea.vmem [#allocation8], %s389
        %p391 = pneg %p150
        %p392 = pneg %p147
        %s393 = sand.u32 %s163, 1
        %s394 = scalar_lea.sflag [#allocation10], %s393
        %s395 = sand.u32 %s163, 1
        %s396 = smul.addr %s395, 256
        %s397 = scalar_lea.vmem [#allocation9], %s396
        %p398 = pneg %p176
        %p399 = pneg %p173
        %p400 = pneg %p204
        %p401 = pneg %p201
        %s402 = sand.u32 %s191, 1
        %s403 = scalar_lea.sflag [#allocation5], %s402
        %s404 = sand.u32 %s191, 1
        %s405 = smul.addr %s404, 256
        %s406 = scalar_lea.vmem [#allocation11], %s405
        %s407 = smul.u32 32, %s33
        %s408 = smul.u32 2, %s35
        %s409 = smul.u32 32, %s35
        %s410 = smul.u32 2, %s34
        %s411 = smul.u32 2, %s34
        %p412 = scmp.lt.s32.totalorder %s411, 5
        %s413 = scalar_select %p412, %s411, 5
        %s414 = scalar_lea.vmem %s2, %s413
        %s415 = smul.u32 2, %s34
        %s416 = smul.u32 32, %s33
        %s417 = smul.u32 32, %s33
        %s418 = smul.u32 32, %s33
        %s419 = smul.u32 2, %s34
        %p420 = scmp.eq.s32.totalorder %s35, 0
        // Predicated region
        $region57: #{tpu_custom_call.1} parent=39 // pred_check
          %p421 = pneg %p420
        $region58: #{tpu_custom_call.1} parent=39 // pred_check_branch
          %423 = sbr.rel (%p421) target = $region60
        $region59: #{tpu_custom_call.1} parent=39 // pred_region
          %424 = vst [vmem:[#allocation2] sm:$0xff] 0.0
          %425 = vst [vmem:[#allocation2 + $0x8] sm:$0xff] 0.0
          %426 = vst [vmem:[#allocation2 + $0x10] sm:$0xff] 0.0
          %427 = vst [vmem:[#allocation2 + $0x18] sm:$0xff] 0.0
          %428 = vst [vmem:[#allocation2 + $0x20] sm:$0xff] 0.0
          %429 = vst [vmem:[#allocation2 + $0x28] sm:$0xff] 0.0
          %430 = vst [vmem:[#allocation2 + $0x30] sm:$0xff] 0.0
          %431 = vst [vmem:[#allocation2 + $0x38] sm:$0xff] 0.0
          %432 = vst [vmem:[#allocation2 + $0x40] sm:$0xff] 0.0
          %433 = vst [vmem:[#allocation2 + $0x48] sm:$0xff] 0.0
          %434 = vst [vmem:[#allocation2 + $0x50] sm:$0xff] 0.0
          %435 = vst [vmem:[#allocation2 + $0x58] sm:$0xff] 0.0
          %436 = vst [vmem:[#allocation2 + $0x60] sm:$0xff] 0.0
          %437 = vst [vmem:[#allocation2 + $0x68] sm:$0xff] 0.0
          %438 = vst [vmem:[#allocation2 + $0x70] sm:$0xff] 0.0
          %439 = vst [vmem:[#allocation2 + $0x78] sm:$0xff] 0.0
          %440 = vst [vmem:[#allocation2 + $0x80] sm:$0xff] 0.0
          %441 = vst [vmem:[#allocation2 + $0x88] sm:$0xff] 0.0
          %442 = vst [vmem:[#allocation2 + $0x90] sm:$0xff] 0.0
          %443 = vst [vmem:[#allocation2 + $0x98] sm:$0xff] 0.0
          %444 = vst [vmem:[#allocation2 + $0xa0] sm:$0xff] 0.0
          %445 = vst [vmem:[#allocation2 + $0xa8] sm:$0xff] 0.0
          %446 = vst [vmem:[#allocation2 + $0xb0] sm:$0xff] 0.0
          %447 = vst [vmem:[#allocation2 + $0xb8] sm:$0xff] 0.0
          %448 = vst [vmem:[#allocation2 + $0xc0] sm:$0xff] 0.0
          %449 = vst [vmem:[#allocation2 + $0xc8] sm:$0xff] 0.0
          %450 = vst [vmem:[#allocation2 + $0xd0] sm:$0xff] 0.0
          %451 = vst [vmem:[#allocation2 + $0xd8] sm:$0xff] 0.0
          %452 = vst [vmem:[#allocation2 + $0xe0] sm:$0xff] 0.0
          %453 = vst [vmem:[#allocation2 + $0xe8] sm:$0xff] 0.0
          %454 = vst [vmem:[#allocation2 + $0xf0] sm:$0xff] 0.0
          %455 = vst [vmem:[#allocation2 + $0xf8] sm:$0xff] 0.0
          %456 = vst [vmem:[#allocation2 + $0x100] sm:$0xff] 0.0
          %457 = vst [vmem:[#allocation2 + $0x108] sm:$0xff] 0.0
          %458 = vst [vmem:[#allocation2 + $0x110] sm:$0xff] 0.0
          %459 = vst [vmem:[#allocation2 + $0x118] sm:$0xff] 0.0
          %460 = vst [vmem:[#allocation2 + $0x120] sm:$0xff] 0.0
          %461 = vst [vmem:[#allocation2 + $0x128] sm:$0xff] 0.0
          %462 = vst [vmem:[#allocation2 + $0x130] sm:$0xff] 0.0
          %463 = vst [vmem:[#allocation2 + $0x138] sm:$0xff] 0.0
          %464 = vst [vmem:[#allocation2 + $0x140] sm:$0xff] 0.0
          %465 = vst [vmem:[#allocation2 + $0x148] sm:$0xff] 0.0
          %466 = vst [vmem:[#allocation2 + $0x150] sm:$0xff] 0.0
          %467 = vst [vmem:[#allocation2 + $0x158] sm:$0xff] 0.0
          %468 = vst [vmem:[#allocation2 + $0x160] sm:$0xff] 0.0
          %469 = vst [vmem:[#allocation2 + $0x168] sm:$0xff] 0.0
          %470 = vst [vmem:[#allocation2 + $0x170] sm:$0xff] 0.0
          %471 = vst [vmem:[#allocation2 + $0x178] sm:$0xff] 0.0
          %472 = vst [vmem:[#allocation2 + $0x180] sm:$0xff] 0.0
          %473 = vst [vmem:[#allocation2 + $0x188] sm:$0xff] 0.0
          %474 = vst [vmem:[#allocation2 + $0x190] sm:$0xff] 0.0
          %475 = vst [vmem:[#allocation2 + $0x198] sm:$0xff] 0.0
          %476 = vst [vmem:[#allocation2 + $0x1a0] sm:$0xff] 0.0
          %477 = vst [vmem:[#allocation2 + $0x1a8] sm:$0xff] 0.0
          %478 = vst [vmem:[#allocation2 + $0x1b0] sm:$0xff] 0.0
          %479 = vst [vmem:[#allocation2 + $0x1b8] sm:$0xff] 0.0
          %480 = vst [vmem:[#allocation2 + $0x1c0] sm:$0xff] 0.0
          %481 = vst [vmem:[#allocation2 + $0x1c8] sm:$0xff] 0.0
          %482 = vst [vmem:[#allocation2 + $0x1d0] sm:$0xff] 0.0
          %483 = vst [vmem:[#allocation2 + $0x1d8] sm:$0xff] 0.0
          %484 = vst [vmem:[#allocation2 + $0x1e0] sm:$0xff] 0.0
          %485 = vst [vmem:[#allocation2 + $0x1e8] sm:$0xff] 0.0
          %486 = vst [vmem:[#allocation2 + $0x1f0] sm:$0xff] 0.0
          %487 = vst [vmem:[#allocation2 + $0x1f8] sm:$0xff] 0.0
        $region60: #{tpu_custom_call.1} parent=39 // pred_fallthru
          _
        %v488 = vld [vmem:[#allocation2] sm:$0xff]
        %v489 = vld [vmem:[#allocation2 + $0x8] sm:$0xff]
        %v490 = vld [vmem:[#allocation2 + $0x10] sm:$0xff]
        %v491 = vld [vmem:[#allocation2 + $0x18] sm:$0xff]
        %v492 = vld [vmem:[#allocation2 + $0x20] sm:$0xff]
        %v493 = vld [vmem:[#allocation2 + $0x28] sm:$0xff]
        %v494 = vld [vmem:[#allocation2 + $0x30] sm:$0xff]
        %v495 = vld [vmem:[#allocation2 + $0x38] sm:$0xff]
        %v496 = vld [vmem:[#allocation2 + $0x40] sm:$0xff]
        %v497 = vld [vmem:[#allocation2 + $0x48] sm:$0xff]
        %v498 = vld [vmem:[#allocation2 + $0x50] sm:$0xff]
        %v499 = vld [vmem:[#allocation2 + $0x58] sm:$0xff]
        %v500 = vld [vmem:[#allocation2 + $0x60] sm:$0xff]
        %v501 = vld [vmem:[#allocation2 + $0x68] sm:$0xff]
        %v502 = vld [vmem:[#allocation2 + $0x70] sm:$0xff]
        %v503 = vld [vmem:[#allocation2 + $0x78] sm:$0xff]
        %v504 = vld [vmem:[#allocation2 + $0x80] sm:$0xff]
        %v505 = vld [vmem:[#allocation2 + $0x88] sm:$0xff]
        %v506 = vld [vmem:[#allocation2 + $0x90] sm:$0xff]
        %v507 = vld [vmem:[#allocation2 + $0x98] sm:$0xff]
        %v508 = vld [vmem:[#allocation2 + $0xa0] sm:$0xff]
        %v509 = vld [vmem:[#allocation2 + $0xa8] sm:$0xff]
        %v510 = vld [vmem:[#allocation2 + $0xb0] sm:$0xff]
        %v511 = vld [vmem:[#allocation2 + $0xb8] sm:$0xff]
        %v512 = vld [vmem:[#allocation2 + $0xc0] sm:$0xff]
        %v513 = vld [vmem:[#allocation2 + $0xc8] sm:$0xff]
        %v514 = vld [vmem:[#allocation2 + $0xd0] sm:$0xff]
        %v515 = vld [vmem:[#allocation2 + $0xd8] sm:$0xff]
        %v516 = vld [vmem:[#allocation2 + $0xe0] sm:$0xff]
        %v517 = vld [vmem:[#allocation2 + $0xe8] sm:$0xff]
        %v518 = vld [vmem:[#allocation2 + $0xf0] sm:$0xff]
        %v519 = vld [vmem:[#allocation2 + $0xf8] sm:$0xff]
        %v520 = vld [vmem:[#allocation2 + $0x100] sm:$0xff]
        %v521 = vld [vmem:[#allocation2 + $0x108] sm:$0xff]
        %v522 = vld [vmem:[#allocation2 + $0x110] sm:$0xff]
        %v523 = vld [vmem:[#allocation2 + $0x118] sm:$0xff]
        %v524 = vld [vmem:[#allocation2 + $0x120] sm:$0xff]
        %v525 = vld [vmem:[#allocation2 + $0x128] sm:$0xff]
        %v526 = vld [vmem:[#allocation2 + $0x130] sm:$0xff]
        %v527 = vld [vmem:[#allocation2 + $0x138] sm:$0xff]
        %v528 = vld [vmem:[#allocation2 + $0x140] sm:$0xff]
        %v529 = vld [vmem:[#allocation2 + $0x148] sm:$0xff]
        %v530 = vld [vmem:[#allocation2 + $0x150] sm:$0xff]
        %v531 = vld [vmem:[#allocation2 + $0x158] sm:$0xff]
        %v532 = vld [vmem:[#allocation2 + $0x160] sm:$0xff]
        %v533 = vld [vmem:[#allocation2 + $0x168] sm:$0xff]
        %v534 = vld [vmem:[#allocation2 + $0x170] sm:$0xff]
        %v535 = vld [vmem:[#allocation2 + $0x178] sm:$0xff]
        %v536 = vld [vmem:[#allocation2 + $0x180] sm:$0xff]
        %v537 = vld [vmem:[#allocation2 + $0x188] sm:$0xff]
        %v538 = vld [vmem:[#allocation2 + $0x190] sm:$0xff]
        %v539 = vld [vmem:[#allocation2 + $0x198] sm:$0xff]
        %v540 = vld [vmem:[#allocation2 + $0x1a0] sm:$0xff]
        %v541 = vld [vmem:[#allocation2 + $0x1a8] sm:$0xff]
        %v542 = vld [vmem:[#allocation2 + $0x1b0] sm:$0xff]
        %v543 = vld [vmem:[#allocation2 + $0x1b8] sm:$0xff]
        %v544 = vld [vmem:[#allocation2 + $0x1c0] sm:$0xff]
        %v545 = vld [vmem:[#allocation2 + $0x1c8] sm:$0xff]
        %v546 = vld [vmem:[#allocation2 + $0x1d0] sm:$0xff]
        %v547 = vld [vmem:[#allocation2 + $0x1d8] sm:$0xff]
        %v548 = vld [vmem:[#allocation2 + $0x1e0] sm:$0xff]
        %v549 = vld [vmem:[#allocation2 + $0x1e8] sm:$0xff]
        %v550 = vld [vmem:[#allocation2 + $0x1f0] sm:$0xff]
        %v551 = vld [vmem:[#allocation2 + $0x1f8] sm:$0xff]
        %v552 = vld [vmem:[%s334] sm:$0xff]
        %v553 = vld [vmem:[%s334 + $0x8] sm:$0xff]
        %v554 = vld [vmem:[%s334 + $0x10] sm:$0xff]
        %v555 = vld [vmem:[%s334 + $0x18] sm:$0xff]
        %v556 = vld [vmem:[%s334 + $0x20] sm:$0xff]
        %v557 = vld [vmem:[%s334 + $0x28] sm:$0xff]
        %v558 = vld [vmem:[%s334 + $0x30] sm:$0xff]
        %v559 = vld [vmem:[%s334 + $0x38] sm:$0xff]
        %v560 = vld [vmem:[%s334 + $0x40] sm:$0xff]
        %v561 = vld [vmem:[%s334 + $0x48] sm:$0xff]
        %v562 = vld [vmem:[%s334 + $0x50] sm:$0xff]
        %v563 = vld [vmem:[%s334 + $0x58] sm:$0xff]
        %v564 = vld [vmem:[%s334 + $0x60] sm:$0xff]
        %v565 = vld [vmem:[%s334 + $0x68] sm:$0xff]
        %v566 = vld [vmem:[%s334 + $0x70] sm:$0xff]
        %v567 = vld [vmem:[%s334 + $0x78] sm:$0xff]
        %v568 = vld [vmem:[%s334 + $0x80] sm:$0xff]
        %v569 = vld [vmem:[%s334 + $0x88] sm:$0xff]
        %v570 = vld [vmem:[%s334 + $0x90] sm:$0xff]
        %v571 = vld [vmem:[%s334 + $0x98] sm:$0xff]
        %v572 = vld [vmem:[%s334 + $0xa0] sm:$0xff]
        %v573 = vld [vmem:[%s334 + $0xa8] sm:$0xff]
        %v574 = vld [vmem:[%s334 + $0xb0] sm:$0xff]
        %v575 = vld [vmem:[%s334 + $0xb8] sm:$0xff]
        %v576 = vld [vmem:[%s334 + $0xc0] sm:$0xff]
        %v577 = vld [vmem:[%s334 + $0xc8] sm:$0xff]
        %v578 = vld [vmem:[%s334 + $0xd0] sm:$0xff]
        %v579 = vld [vmem:[%s334 + $0xd8] sm:$0xff]
        %v580 = vld [vmem:[%s334 + $0xe0] sm:$0xff]
        %v581 = vld [vmem:[%s334 + $0xe8] sm:$0xff]
        %v582 = vld [vmem:[%s334 + $0xf0] sm:$0xff]
        %v583 = vld [vmem:[%s334 + $0xf8] sm:$0xff]
        %v584 = vld [vmem:[%s343] sm:$0xff]
        %v585 = vld [vmem:[%s343 + $0x8] sm:$0xff]
        %v586 = vld [vmem:[%s343 + $0x10] sm:$0xff]
        %v587 = vld [vmem:[%s343 + $0x18] sm:$0xff]
        %v588 = vld [vmem:[%s343 + $0x20] sm:$0xff]
        %v589 = vld [vmem:[%s343 + $0x28] sm:$0xff]
        %v590 = vld [vmem:[%s343 + $0x30] sm:$0xff]
        %v591 = vld [vmem:[%s343 + $0x38] sm:$0xff]
        %v592 = vld [vmem:[%s343 + $0x40] sm:$0xff]
        %v593 = vld [vmem:[%s343 + $0x48] sm:$0xff]
        %v594 = vld [vmem:[%s343 + $0x50] sm:$0xff]
        %v595 = vld [vmem:[%s343 + $0x58] sm:$0xff]
        %v596 = vld [vmem:[%s343 + $0x60] sm:$0xff]
        %v597 = vld [vmem:[%s343 + $0x68] sm:$0xff]
        %v598 = vld [vmem:[%s343 + $0x70] sm:$0xff]
        %v599 = vld [vmem:[%s343 + $0x78] sm:$0xff]
        %v600 = vld [vmem:[%s343 + $0x80] sm:$0xff]
        %v601 = vld [vmem:[%s343 + $0x88] sm:$0xff]
        %v602 = vld [vmem:[%s343 + $0x90] sm:$0xff]
        %v603 = vld [vmem:[%s343 + $0x98] sm:$0xff]
        %v604 = vld [vmem:[%s343 + $0xa0] sm:$0xff]
        %v605 = vld [vmem:[%s343 + $0xa8] sm:$0xff]
        %v606 = vld [vmem:[%s343 + $0xb0] sm:$0xff]
        %v607 = vld [vmem:[%s343 + $0xb8] sm:$0xff]
        %v608 = vld [vmem:[%s343 + $0xc0] sm:$0xff]
        %v609 = vld [vmem:[%s343 + $0xc8] sm:$0xff]
        %v610 = vld [vmem:[%s343 + $0xd0] sm:$0xff]
        %v611 = vld [vmem:[%s343 + $0xd8] sm:$0xff]
        %v612 = vld [vmem:[%s343 + $0xe0] sm:$0xff]
        %v613 = vld [vmem:[%s343 + $0xe8] sm:$0xff]
        %v614 = vld [vmem:[%s343 + $0xf0] sm:$0xff]
        %v615 = vld [vmem:[%s343 + $0xf8] sm:$0xff]
        %v648 = vunpack.c.l.b16 %v552
        %v649 = vunpack.c.h.b16 %v552
        %v650 = vunpack.c.l.b16 %v553
        %v651 = vunpack.c.h.b16 %v553
        %v652 = vunpack.c.l.b16 %v554
        %v653 = vunpack.c.h.b16 %v554
        %v654 = vunpack.c.l.b16 %v555
        %v655 = vunpack.c.h.b16 %v555
        %v656 = vunpack.c.l.b16 %v556
        %v657 = vunpack.c.h.b16 %v556
        %v658 = vunpack.c.l.b16 %v557
        %v659 = vunpack.c.h.b16 %v557
        %v660 = vunpack.c.l.b16 %v558
        %v661 = vunpack.c.h.b16 %v558
        %v662 = vunpack.c.l.b16 %v559
        %v663 = vunpack.c.h.b16 %v559
        %v664 = vunpack.c.l.b16 %v560
        %v665 = vunpack.c.h.b16 %v560
        %v666 = vunpack.c.l.b16 %v561
        %v667 = vunpack.c.h.b16 %v561
        %v668 = vunpack.c.l.b16 %v562
        %v669 = vunpack.c.h.b16 %v562
        %v670 = vunpack.c.l.b16 %v563
        %v671 = vunpack.c.h.b16 %v563
        %v672 = vunpack.c.l.b16 %v564
        %v673 = vunpack.c.h.b16 %v564
        %v674 = vunpack.c.l.b16 %v565
        %v675 = vunpack.c.h.b16 %v565
        %v676 = vunpack.c.l.b16 %v566
        %v677 = vunpack.c.h.b16 %v566
        %v678 = vunpack.c.l.b16 %v567
        %v679 = vunpack.c.h.b16 %v567
        %v680 = vunpack.c.l.b16 %v568
        %v681 = vunpack.c.h.b16 %v568
        %v682 = vunpack.c.l.b16 %v569
        %v683 = vunpack.c.h.b16 %v569
        %v684 = vunpack.c.l.b16 %v570
        %v685 = vunpack.c.h.b16 %v570
        %v686 = vunpack.c.l.b16 %v571
        %v687 = vunpack.c.h.b16 %v571
        %v688 = vunpack.c.l.b16 %v572
        %v689 = vunpack.c.h.b16 %v572
        %v690 = vunpack.c.l.b16 %v573
        %v691 = vunpack.c.h.b16 %v573
        %v692 = vunpack.c.l.b16 %v574
        %v693 = vunpack.c.h.b16 %v574
        %v694 = vunpack.c.l.b16 %v575
        %v695 = vunpack.c.h.b16 %v575
        %v696 = vunpack.c.l.b16 %v576
        %v697 = vunpack.c.h.b16 %v576
        %v698 = vunpack.c.l.b16 %v577
        %v699 = vunpack.c.h.b16 %v577
        %v700 = vunpack.c.l.b16 %v578
        %v701 = vunpack.c.h.b16 %v578
        %v702 = vunpack.c.l.b16 %v579
        %v703 = vunpack.c.h.b16 %v579
        %v704 = vunpack.c.l.b16 %v580
        %v705 = vunpack.c.h.b16 %v580
        %v706 = vunpack.c.l.b16 %v581
        %v707 = vunpack.c.h.b16 %v581
        %v708 = vunpack.c.l.b16 %v582
        %v709 = vunpack.c.h.b16 %v582
        %v710 = vunpack.c.l.b16 %v583
        %v711 = vunpack.c.h.b16 %v583
        %v712 = vpack.c.b16 %v650, %v648
        %v713 = vpack.c.b16 %v651, %v649
        %v714 = vpack.c.b16 %v654, %v652
        %v715 = vpack.c.b16 %v655, %v653
        %v716 = vpack.c.b16 %v658, %v656
        %v717 = vpack.c.b16 %v659, %v657
        %v718 = vpack.c.b16 %v662, %v660
        %v719 = vpack.c.b16 %v663, %v661
        %v720 = vpack.c.b16 %v666, %v664
        %v721 = vpack.c.b16 %v667, %v665
        %v722 = vpack.c.b16 %v670, %v668
        %v723 = vpack.c.b16 %v671, %v669
        %v724 = vpack.c.b16 %v674, %v672
        %v725 = vpack.c.b16 %v675, %v673
        %v726 = vpack.c.b16 %v678, %v676
        %v727 = vpack.c.b16 %v679, %v677
        %v728 = vpack.c.b16 %v682, %v680
        %v729 = vpack.c.b16 %v683, %v681
        %v730 = vpack.c.b16 %v686, %v684
        %v731 = vpack.c.b16 %v687, %v685
        %v732 = vpack.c.b16 %v690, %v688
        %v733 = vpack.c.b16 %v691, %v689
        %v734 = vpack.c.b16 %v694, %v692
        %v735 = vpack.c.b16 %v695, %v693
        %v736 = vpack.c.b16 %v698, %v696
        %v737 = vpack.c.b16 %v699, %v697
        %v738 = vpack.c.b16 %v702, %v700
        %v739 = vpack.c.b16 %v703, %v701
        %v740 = vpack.c.b16 %v706, %v704
        %v741 = vpack.c.b16 %v707, %v705
        %v742 = vpack.c.b16 %v710, %v708
        %v743 = vpack.c.b16 %v711, %v709
        %v808 = vunpack.c.l.b16 %v584
        %v809 = vunpack.c.h.b16 %v584
        %v810 = vunpack.c.l.b16 %v585
        %v811 = vunpack.c.h.b16 %v585
        %v812 = vunpack.c.l.b16 %v586
        %v813 = vunpack.c.h.b16 %v586
        %v814 = vunpack.c.l.b16 %v587
        %v815 = vunpack.c.h.b16 %v587
        %v816 = vunpack.c.l.b16 %v588
        %v817 = vunpack.c.h.b16 %v588
        %v818 = vunpack.c.l.b16 %v589
        %v819 = vunpack.c.h.b16 %v589
        %v820 = vunpack.c.l.b16 %v590
        %v821 = vunpack.c.h.b16 %v590
        %v822 = vunpack.c.l.b16 %v591
        %v823 = vunpack.c.h.b16 %v591
        %v824 = vunpack.c.l.b16 %v592
        %v825 = vunpack.c.h.b16 %v592
        %v826 = vunpack.c.l.b16 %v593
        %v827 = vunpack.c.h.b16 %v593
        %v828 = vunpack.c.l.b16 %v594
        %v829 = vunpack.c.h.b16 %v594
        %v830 = vunpack.c.l.b16 %v595
        %v831 = vunpack.c.h.b16 %v595
        %v832 = vunpack.c.l.b16 %v596
        %v833 = vunpack.c.h.b16 %v596
        %v834 = vunpack.c.l.b16 %v597
        %v835 = vunpack.c.h.b16 %v597
        %v836 = vunpack.c.l.b16 %v598
        %v837 = vunpack.c.h.b16 %v598
        %v838 = vunpack.c.l.b16 %v599
        %v839 = vunpack.c.h.b16 %v599
        %v840 = vunpack.c.l.b16 %v600
        %v841 = vunpack.c.h.b16 %v600
        %v842 = vunpack.c.l.b16 %v601
        %v843 = vunpack.c.h.b16 %v601
        %v844 = vunpack.c.l.b16 %v602
        %v845 = vunpack.c.h.b16 %v602
        %v846 = vunpack.c.l.b16 %v603
        %v847 = vunpack.c.h.b16 %v603
        %v848 = vunpack.c.l.b16 %v604
        %v849 = vunpack.c.h.b16 %v604
        %v850 = vunpack.c.l.b16 %v605
        %v851 = vunpack.c.h.b16 %v605
        %v852 = vunpack.c.l.b16 %v606
        %v853 = vunpack.c.h.b16 %v606
        %v854 = vunpack.c.l.b16 %v607
        %v855 = vunpack.c.h.b16 %v607
        %v856 = vunpack.c.l.b16 %v608
        %v857 = vunpack.c.h.b16 %v608
        %v858 = vunpack.c.l.b16 %v609
        %v859 = vunpack.c.h.b16 %v609
        %v860 = vunpack.c.l.b16 %v610
        %v861 = vunpack.c.h.b16 %v610
        %v862 = vunpack.c.l.b16 %v611
        %v863 = vunpack.c.h.b16 %v611
        %v864 = vunpack.c.l.b16 %v612
        %v865 = vunpack.c.h.b16 %v612
        %v866 = vunpack.c.l.b16 %v613
        %v867 = vunpack.c.h.b16 %v613
        %v868 = vunpack.c.l.b16 %v614
        %v869 = vunpack.c.h.b16 %v614
        %v870 = vunpack.c.l.b16 %v615
        %v871 = vunpack.c.h.b16 %v615
        %v872 = vpack.c.b16 %v810, %v808
        %v873 = vpack.c.b16 %v811, %v809
        %v874 = vpack.c.b16 %v814, %v812
        %v875 = vpack.c.b16 %v815, %v813
        %v876 = vpack.c.b16 %v818, %v816
        %v877 = vpack.c.b16 %v819, %v817
        %v878 = vpack.c.b16 %v822, %v820
        %v879 = vpack.c.b16 %v823, %v821
        %v880 = vpack.c.b16 %v826, %v824
        %v881 = vpack.c.b16 %v827, %v825
        %v882 = vpack.c.b16 %v830, %v828
        %v883 = vpack.c.b16 %v831, %v829
        %v884 = vpack.c.b16 %v834, %v832
        %v885 = vpack.c.b16 %v835, %v833
        %v886 = vpack.c.b16 %v838, %v836
        %v887 = vpack.c.b16 %v839, %v837
        %v888 = vpack.c.b16 %v842, %v840
        %v889 = vpack.c.b16 %v843, %v841
        %v890 = vpack.c.b16 %v846, %v844
        %v891 = vpack.c.b16 %v847, %v845
        %v892 = vpack.c.b16 %v850, %v848
        %v893 = vpack.c.b16 %v851, %v849
        %v894 = vpack.c.b16 %v854, %v852
        %v895 = vpack.c.b16 %v855, %v853
        %v896 = vpack.c.b16 %v858, %v856
        %v897 = vpack.c.b16 %v859, %v857
        %v898 = vpack.c.b16 %v862, %v860
        %v899 = vpack.c.b16 %v863, %v861
        %v900 = vpack.c.b16 %v866, %v864
        %v901 = vpack.c.b16 %v867, %v865
        %v902 = vpack.c.b16 %v870, %v868
        %v903 = vpack.c.b16 %v871, %v869
        %936 = vmatprep.subr.bf16.mxu0 %v873
        %937 = vmatpush1.bf16.msra.mxu0 %v872
        %938 = vmatprep.subr.bf16.mxu0 %v875
        %939 = vmatpush1.bf16.msra.mxu0 %v874
        %940 = vmatprep.subr.bf16.mxu0 %v877
        %941 = vmatpush1.bf16.msra.mxu0 %v876
        %942 = vmatprep.subr.bf16.mxu0 %v879
        %943 = vmatpush1.bf16.msra.mxu0 %v878
        %944 = vmatprep.subr.bf16.mxu0 %v881
        %945 = vmatpush1.bf16.msra.mxu0 %v880
        %946 = vmatprep.subr.bf16.mxu0 %v883
        %947 = vmatpush1.bf16.msra.mxu0 %v882
        %948 = vmatprep.subr.bf16.mxu0 %v885
        %949 = vmatpush1.bf16.msra.mxu0 %v884
        %950 = vmatprep.subr.bf16.mxu0 %v887
        %951 = vmatpush1.bf16.msra.mxu0 %v886
        %952 = vmatprep.subr.bf16.mxu0 %v889
        %953 = vmatpush1.bf16.msra.mxu0 %v888
        %954 = vmatprep.subr.bf16.mxu0 %v891
        %955 = vmatpush1.bf16.msra.mxu0 %v890
        %956 = vmatprep.subr.bf16.mxu0 %v893
        %957 = vmatpush1.bf16.msra.mxu0 %v892
        %958 = vmatprep.subr.bf16.mxu0 %v895
        %959 = vmatpush1.bf16.msra.mxu0 %v894
        %960 = vmatprep.subr.bf16.mxu0 %v897
        %961 = vmatpush1.bf16.msra.mxu0 %v896
        %962 = vmatprep.subr.bf16.mxu0 %v899
        %963 = vmatpush1.bf16.msra.mxu0 %v898
        %964 = vmatprep.subr.bf16.mxu0 %v901
        %965 = vmatpush1.bf16.msra.mxu0 %v900
        %966 = vmatprep.subr.bf16.mxu0 %v903
        %967 = vmatpush1.bf16.msra.mxu0 %v902
        %968 = vmatprep.mubr.bf16.mxu0 %v713
        %969 = vmatmul.mubr.bf16.gmra.mrb[0].mxu0 %v712
        %v970 = vpop.f32.mrb[0].mxu0
        %v971 = vadd.f32 0.0, %v970
        %v972 = vpop.f32.mrb[0].mxu0
        %v973 = vadd.f32 0.0, %v972
        %v974 = vpop.f32.mrb[0].mxu0
        %v975 = vadd.f32 0.0, %v974
        %v976 = vpop.f32.mrb[0].mxu0
        %v977 = vadd.f32 0.0, %v976
        %978 = vmatprep.mubr.bf16.mxu0 %v715
        %979 = vmatmul.mubr.bf16.gmra.mrb[0].mxu0 %v714
        %v980 = vpop.f32.mrb[0].mxu0
        %v981 = vadd.f32 0.0, %v980
        %v982 = vpop.f32.mrb[0].mxu0
        %v983 = vadd.f32 0.0, %v982
        %v984 = vpop.f32.mrb[0].mxu0
        %v985 = vadd.f32 0.0, %v984
        %v986 = vpop.f32.mrb[0].mxu0
        %v987 = vadd.f32 0.0, %v986
        %988 = vmatprep.mubr.bf16.mxu0 %v717
        %989 = vmatmul.mubr.bf16.gmra.mrb[0].mxu0 %v716
        %v990 = vpop.f32.mrb[0].mxu0
        %v991 = vadd.f32 0.0, %v990
        %v992 = vpop.f32.mrb[0].mxu0
        %v993 = vadd.f32 0.0, %v992
        %v994 = vpop.f32.mrb[0].mxu0
        %v995 = vadd.f32 0.0, %v994
        %v996 = vpop.f32.mrb[0].mxu0
        %v997 = vadd.f32 0.0, %v996
        %998 = vmatprep.mubr.bf16.mxu0 %v719
        %999 = vmatmul.mubr.bf16.gmra.mrb[0].mxu0 %v718
        %v1000 = vpop.f32.mrb[0].mxu0
        %v1001 = vadd.f32 0.0, %v1000
        %v1002 = vpop.f32.mrb[0].mxu0
        %v1003 = vadd.f32 0.0, %v1002
        %v1004 = vpop.f32.mrb[0].mxu0
        %v1005 = vadd.f32 0.0, %v1004
        %v1006 = vpop.f32.mrb[0].mxu0
        %v1007 = vadd.f32 0.0, %v1006
        %1008 = vmatprep.mubr.bf16.mxu0 %v721
        %1009 = vmatmul.mubr.bf16.gmra.mrb[0].mxu0 %v720
        %v1010 = vpop.f32.mrb[0].mxu0
        %v1011 = vadd.f32 0.0, %v1010
        %v1012 = vpop.f32.mrb[0].mxu0
        %v1013 = vadd.f32 0.0, %v1012
        %v1014 = vpop.f32.mrb[0].mxu0
        %v1015 = vadd.f32 0.0, %v1014
        %v1016 = vpop.f32.mrb[0].mxu0
        %v1017 = vadd.f32 0.0, %v1016
        %1018 = vmatprep.mubr.bf16.mxu0 %v723
        %1019 = vmatmul.mubr.bf16.gmra.mrb[0].mxu0 %v722
        %v1020 = vpop.f32.mrb[0].mxu0
        %v1021 = vadd.f32 0.0, %v1020
        %v1022 = vpop.f32.mrb[0].mxu0
        %v1023 = vadd.f32 0.0, %v1022
        %v1024 = vpop.f32.mrb[0].mxu0
        %v1025 = vadd.f32 0.0, %v1024
        %v1026 = vpop.f32.mrb[0].mxu0
        %v1027 = vadd.f32 0.0, %v1026
        %1028 = vmatprep.mubr.bf16.mxu0 %v725
        %1029 = vmatmul.mubr.bf16.gmra.mrb[0].mxu0 %v724
        %v1030 = vpop.f32.mrb[0].mxu0
        %v1031 = vadd.f32 0.0, %v1030
        %v1032 = vpop.f32.mrb[0].mxu0
        %v1033 = vadd.f32 0.0, %v1032
        %v1034 = vpop.f32.mrb[0].mxu0
        %v1035 = vadd.f32 0.0, %v1034
        %v1036 = vpop.f32.mrb[0].mxu0
        %v1037 = vadd.f32 0.0, %v1036
        %1038 = vmatprep.mubr.bf16.mxu0 %v727
        %1039 = vmatmul.mubr.bf16.gmra.mrb[0].mxu0 %v726
        %v1040 = vpop.f32.mrb[0].mxu0
        %v1041 = vadd.f32 0.0, %v1040
        %v1042 = vpop.f32.mrb[0].mxu0
        %v1043 = vadd.f32 0.0, %v1042
        %v1044 = vpop.f32.mrb[0].mxu0
        %v1045 = vadd.f32 0.0, %v1044
        %v1046 = vpop.f32.mrb[0].mxu0
        %v1047 = vadd.f32 0.0, %v1046
        %1048 = vmatprep.mubr.bf16.mxu0 %v729
        %1049 = vmatmul.mubr.bf16.gmra.mrb[0].mxu0 %v728
        %v1050 = vpop.f32.mrb[0].mxu0
        %v1051 = vadd.f32 0.0, %v1050
        %v1052 = vpop.f32.mrb[0].mxu0
        %v1053 = vadd.f32 0.0, %v1052
        %v1054 = vpop.f32.mrb[0].mxu0
        %v1055 = vadd.f32 0.0, %v1054
        %v1056 = vpop.f32.mrb[0].mxu0
        %v1057 = vadd.f32 0.0, %v1056
        %1058 = vmatprep.mubr.bf16.mxu0 %v731
        %1059 = vmatmul.mubr.bf16.gmra.mrb[0].mxu0 %v730
        %v1060 = vpop.f32.mrb[0].mxu0
        %v1061 = vadd.f32 0.0, %v1060
        %v1062 = vpop.f32.mrb[0].mxu0
        %v1063 = vadd.f32 0.0, %v1062
        %v1064 = vpop.f32.mrb[0].mxu0
        %v1065 = vadd.f32 0.0, %v1064
        %v1066 = vpop.f32.mrb[0].mxu0
        %v1067 = vadd.f32 0.0, %v1066
        %1068 = vmatprep.mubr.bf16.mxu0 %v733
        %1069 = vmatmul.mubr.bf16.gmra.mrb[0].mxu0 %v732
        %v1070 = vpop.f32.mrb[0].mxu0
        %v1071 = vadd.f32 0.0, %v1070
        %v1072 = vpop.f32.mrb[0].mxu0
        %v1073 = vadd.f32 0.0, %v1072
        %v1074 = vpop.f32.mrb[0].mxu0
        %v1075 = vadd.f32 0.0, %v1074
        %v1076 = vpop.f32.mrb[0].mxu0
        %v1077 = vadd.f32 0.0, %v1076
        %1078 = vmatprep.mubr.bf16.mxu0 %v735
        %1079 = vmatmul.mubr.bf16.gmra.mrb[0].mxu0 %v734
        %v1080 = vpop.f32.mrb[0].mxu0
        %v1081 = vadd.f32 0.0, %v1080
        %v1082 = vpop.f32.mrb[0].mxu0
        %v1083 = vadd.f32 0.0, %v1082
        %v1084 = vpop.f32.mrb[0].mxu0
        %v1085 = vadd.f32 0.0, %v1084
        %v1086 = vpop.f32.mrb[0].mxu0
        %v1087 = vadd.f32 0.0, %v1086
        %1088 = vmatprep.mubr.bf16.mxu0 %v737
        %1089 = vmatmul.mubr.bf16.gmra.mrb[0].mxu0 %v736
        %v1090 = vpop.f32.mrb[0].mxu0
        %v1091 = vadd.f32 0.0, %v1090
        %v1092 = vpop.f32.mrb[0].mxu0
        %v1093 = vadd.f32 0.0, %v1092
        %v1094 = vpop.f32.mrb[0].mxu0
        %v1095 = vadd.f32 0.0, %v1094
        %v1096 = vpop.f32.mrb[0].mxu0
        %v1097 = vadd.f32 0.0, %v1096
        %1098 = vmatprep.mubr.bf16.mxu0 %v739
        %1099 = vmatmul.mubr.bf16.gmra.mrb[0].mxu0 %v738
        %v1100 = vpop.f32.mrb[0].mxu0
        %v1101 = vadd.f32 0.0, %v1100
        %v1102 = vpop.f32.mrb[0].mxu0
        %v1103 = vadd.f32 0.0, %v1102
        %v1104 = vpop.f32.mrb[0].mxu0
        %v1105 = vadd.f32 0.0, %v1104
        %v1106 = vpop.f32.mrb[0].mxu0
        %v1107 = vadd.f32 0.0, %v1106
        %1108 = vmatprep.mubr.bf16.mxu0 %v741
        %1109 = vmatmul.mubr.bf16.gmra.mrb[0].mxu0 %v740
        %v1110 = vpop.f32.mrb[0].mxu0
        %v1111 = vadd.f32 0.0, %v1110
        %v1112 = vpop.f32.mrb[0].mxu0
        %v1113 = vadd.f32 0.0, %v1112
        %v1114 = vpop.f32.mrb[0].mxu0
        %v1115 = vadd.f32 0.0, %v1114
        %v1116 = vpop.f32.mrb[0].mxu0
        %v1117 = vadd.f32 0.0, %v1116
        %1118 = vmatprep.mubr.bf16.mxu0 %v743
        %1119 = vmatmul.mubr.bf16.gmra.mrb[0].mxu0 %v742
        %v1120 = vpop.f32.mrb[0].mxu0
        %v1121 = vadd.f32 0.0, %v1120
        %v1122 = vpop.f32.mrb[0].mxu0
        %v1123 = vadd.f32 0.0, %v1122
        %v1124 = vpop.f32.mrb[0].mxu0
        %v1125 = vadd.f32 0.0, %v1124
        %v1126 = vpop.f32.mrb[0].mxu0
        %v1127 = vadd.f32 0.0, %v1126
        %1128 = vdwg.mxu0
        %v1129 = vadd.f32 %v488, %v971
        %v1130 = vadd.f32 %v489, %v973
        %v1131 = vadd.f32 %v490, %v975
        %v1132 = vadd.f32 %v491, %v977
        %v1133 = vadd.f32 %v492, %v981
        %v1134 = vadd.f32 %v493, %v983
        %v1135 = vadd.f32 %v494, %v985
        %v1136 = vadd.f32 %v495, %v987
        %v1137 = vadd.f32 %v496, %v991
        %v1138 = vadd.f32 %v497, %v993
        %v1139 = vadd.f32 %v498, %v995
        %v1140 = vadd.f32 %v499, %v997
        %v1141 = vadd.f32 %v500, %v1001
        %v1142 = vadd.f32 %v501, %v1003
        %v1143 = vadd.f32 %v502, %v1005
        %v1144 = vadd.f32 %v503, %v1007
        %v1145 = vadd.f32 %v504, %v1011
        %v1146 = vadd.f32 %v505, %v1013
        %v1147 = vadd.f32 %v506, %v1015
        %v1148 = vadd.f32 %v507, %v1017
        %v1149 = vadd.f32 %v508, %v1021
        %v1150 = vadd.f32 %v509, %v1023
        %v1151 = vadd.f32 %v510, %v1025
        %v1152 = vadd.f32 %v511, %v1027
        %v1153 = vadd.f32 %v512, %v1031
        %v1154 = vadd.f32 %v513, %v1033
        %v1155 = vadd.f32 %v514, %v1035
        %v1156 = vadd.f32 %v515, %v1037
        %v1157 = vadd.f32 %v516, %v1041
        %v1158 = vadd.f32 %v517, %v1043
        %v1159 = vadd.f32 %v518, %v1045
        %v1160 = vadd.f32 %v519, %v1047
        %v1161 = vadd.f32 %v520, %v1051
        %v1162 = vadd.f32 %v521, %v1053
        %v1163 = vadd.f32 %v522, %v1055
        %v1164 = vadd.f32 %v523, %v1057
        %v1165 = vadd.f32 %v524, %v1061
        %v1166 = vadd.f32 %v525, %v1063
        %v1167 = vadd.f32 %v526, %v1065
        %v1168 = vadd.f32 %v527, %v1067
        %v1169 = vadd.f32 %v528, %v1071
        %v1170 = vadd.f32 %v529, %v1073
        %v1171 = vadd.f32 %v530, %v1075
        %v1172 = vadd.f32 %v531, %v1077
        %v1173 = vadd.f32 %v532, %v1081
        %v1174 = vadd.f32 %v533, %v1083
        %v1175 = vadd.f32 %v534, %v1085
        %v1176 = vadd.f32 %v535, %v1087
        %v1177 = vadd.f32 %v536, %v1091
        %v1178 = vadd.f32 %v537, %v1093
        %v1179 = vadd.f32 %v538, %v1095
        %v1180 = vadd.f32 %v539, %v1097
        %v1181 = vadd.f32 %v540, %v1101
        %v1182 = vadd.f32 %v541, %v1103
        %v1183 = vadd.f32 %v542, %v1105
        %v1184 = vadd.f32 %v543, %v1107
        %v1185 = vadd.f32 %v544, %v1111
        %v1186 = vadd.f32 %v545, %v1113
        %v1187 = vadd.f32 %v546, %v1115
        %v1188 = vadd.f32 %v547, %v1117
        %v1189 = vadd.f32 %v548, %v1121
        %v1190 = vadd.f32 %v549, %v1123
        %v1191 = vadd.f32 %v550, %v1125
        %v1192 = vadd.f32 %v551, %v1127
        %1193 = vst [vmem:[#allocation2] sm:$0xff] %v1129
        %1194 = vst [vmem:[#allocation2 + $0x8] sm:$0xff] %v1130
        %1195 = vst [vmem:[#allocation2 + $0x10] sm:$0xff] %v1131
        %1196 = vst [vmem:[#allocation2 + $0x18] sm:$0xff] %v1132
        %1197 = vst [vmem:[#allocation2 + $0x20] sm:$0xff] %v1133
        %1198 = vst [vmem:[#allocation2 + $0x28] sm:$0xff] %v1134
        %1199 = vst [vmem:[#allocation2 + $0x30] sm:$0xff] %v1135
        %1200 = vst [vmem:[#allocation2 + $0x38] sm:$0xff] %v1136
        %1201 = vst [vmem:[#allocation2 + $0x40] sm:$0xff] %v1137
        %1202 = vst [vmem:[#allocation2 + $0x48] sm:$0xff] %v1138
        %1203 = vst [vmem:[#allocation2 + $0x50] sm:$0xff] %v1139
        %1204 = vst [vmem:[#allocation2 + $0x58] sm:$0xff] %v1140
        %1205 = vst [vmem:[#allocation2 + $0x60] sm:$0xff] %v1141
        %1206 = vst [vmem:[#allocation2 + $0x68] sm:$0xff] %v1142
        %1207 = vst [vmem:[#allocation2 + $0x70] sm:$0xff] %v1143
        %1208 = vst [vmem:[#allocation2 + $0x78] sm:$0xff] %v1144
        %1209 = vst [vmem:[#allocation2 + $0x80] sm:$0xff] %v1145
        %1210 = vst [vmem:[#allocation2 + $0x88] sm:$0xff] %v1146
        %1211 = vst [vmem:[#allocation2 + $0x90] sm:$0xff] %v1147
        %1212 = vst [vmem:[#allocation2 + $0x98] sm:$0xff] %v1148
        %1213 = vst [vmem:[#allocation2 + $0xa0] sm:$0xff] %v1149
        %1214 = vst [vmem:[#allocation2 + $0xa8] sm:$0xff] %v1150
        %1215 = vst [vmem:[#allocation2 + $0xb0] sm:$0xff] %v1151
        %1216 = vst [vmem:[#allocation2 + $0xb8] sm:$0xff] %v1152
        %1217 = vst [vmem:[#allocation2 + $0xc0] sm:$0xff] %v1153
        %1218 = vst [vmem:[#allocation2 + $0xc8] sm:$0xff] %v1154
        %1219 = vst [vmem:[#allocation2 + $0xd0] sm:$0xff] %v1155
        %1220 = vst [vmem:[#allocation2 + $0xd8] sm:$0xff] %v1156
        %1221 = vst [vmem:[#allocation2 + $0xe0] sm:$0xff] %v1157
        %1222 = vst [vmem:[#allocation2 + $0xe8] sm:$0xff] %v1158
        %1223 = vst [vmem:[#allocation2 + $0xf0] sm:$0xff] %v1159
        %1224 = vst [vmem:[#allocation2 + $0xf8] sm:$0xff] %v1160
        %1225 = vst [vmem:[#allocation2 + $0x100] sm:$0xff] %v1161
        %1226 = vst [vmem:[#allocation2 + $0x108] sm:$0xff] %v1162
        %1227 = vst [vmem:[#allocation2 + $0x110] sm:$0xff] %v1163
        %1228 = vst [vmem:[#allocation2 + $0x118] sm:$0xff] %v1164
        %1229 = vst [vmem:[#allocation2 + $0x120] sm:$0xff] %v1165
        %1230 = vst [vmem:[#allocation2 + $0x128] sm:$0xff] %v1166
        %1231 = vst [vmem:[#allocation2 + $0x130] sm:$0xff] %v1167
        %1232 = vst [vmem:[#allocation2 + $0x138] sm:$0xff] %v1168
        %1233 = vst [vmem:[#allocation2 + $0x140] sm:$0xff] %v1169
        %1234 = vst [vmem:[#allocation2 + $0x148] sm:$0xff] %v1170
        %1235 = vst [vmem:[#allocation2 + $0x150] sm:$0xff] %v1171
        %1236 = vst [vmem:[#allocation2 + $0x158] sm:$0xff] %v1172
        %1237 = vst [vmem:[#allocation2 + $0x160] sm:$0xff] %v1173
        %1238 = vst [vmem:[#allocation2 + $0x168] sm:$0xff] %v1174
        %1239 = vst [vmem:[#allocation2 + $0x170] sm:$0xff] %v1175
        %1240 = vst [vmem:[#allocation2 + $0x178] sm:$0xff] %v1176
        %1241 = vst [vmem:[#allocation2 + $0x180] sm:$0xff] %v1177
        %1242 = vst [vmem:[#allocation2 + $0x188] sm:$0xff] %v1178
        %1243 = vst [vmem:[#allocation2 + $0x190] sm:$0xff] %v1179
        %1244 = vst [vmem:[#allocation2 + $0x198] sm:$0xff] %v1180
        %1245 = vst [vmem:[#allocation2 + $0x1a0] sm:$0xff] %v1181
        %1246 = vst [vmem:[#allocation2 + $0x1a8] sm:$0xff] %v1182
        %1247 = vst [vmem:[#allocation2 + $0x1b0] sm:$0xff] %v1183
        %1248 = vst [vmem:[#allocation2 + $0x1b8] sm:$0xff] %v1184
        %1249 = vst [vmem:[#allocation2 + $0x1c0] sm:$0xff] %v1185
        %1250 = vst [vmem:[#allocation2 + $0x1c8] sm:$0xff] %v1186
        %1251 = vst [vmem:[#allocation2 + $0x1d0] sm:$0xff] %v1187
        %1252 = vst [vmem:[#allocation2 + $0x1d8] sm:$0xff] %v1188
        %1253 = vst [vmem:[#allocation2 + $0x1e0] sm:$0xff] %v1189
        %1254 = vst [vmem:[#allocation2 + $0x1e8] sm:$0xff] %v1190
        %1255 = vst [vmem:[#allocation2 + $0x1f0] sm:$0xff] %v1191
        %1256 = vst [vmem:[#allocation2 + $0x1f8] sm:$0xff] %v1192
        // Predicated region
        $region61: #{tpu_custom_call.1} parent=39 // pred_check
          %p1257 = pneg %p420
        $region62: #{tpu_custom_call.1} parent=39 // pred_check_branch
          %1259 = sbr.rel (%p1257) target = $region64
        $region63: #{tpu_custom_call.1} parent=39 // pred_region
          %v1260 = vld [vmem:[#allocation2] sm:$0xff]
          %v1261 = vld [vmem:[#allocation2 + $0x8] sm:$0xff]
          %v1262 = vld [vmem:[#allocation2 + $0x10] sm:$0xff]
          %v1263 = vld [vmem:[#allocation2 + $0x18] sm:$0xff]
          %v1264 = vld [vmem:[#allocation2 + $0x20] sm:$0xff]
          %v1265 = vld [vmem:[#allocation2 + $0x28] sm:$0xff]
          %v1266 = vld [vmem:[#allocation2 + $0x30] sm:$0xff]
          %v1267 = vld [vmem:[#allocation2 + $0x38] sm:$0xff]
          %v1268 = vld [vmem:[#allocation2 + $0x40] sm:$0xff]
          %v1269 = vld [vmem:[#allocation2 + $0x48] sm:$0xff]
          %v1270 = vld [vmem:[#allocation2 + $0x50] sm:$0xff]
          %v1271 = vld [vmem:[#allocation2 + $0x58] sm:$0xff]
          %v1272 = vld [vmem:[#allocation2 + $0x60] sm:$0xff]
          %v1273 = vld [vmem:[#allocation2 + $0x68] sm:$0xff]
          %v1274 = vld [vmem:[#allocation2 + $0x70] sm:$0xff]
          %v1275 = vld [vmem:[#allocation2 + $0x78] sm:$0xff]
          %v1276 = vld [vmem:[#allocation2 + $0x80] sm:$0xff]
          %v1277 = vld [vmem:[#allocation2 + $0x88] sm:$0xff]
          %v1278 = vld [vmem:[#allocation2 + $0x90] sm:$0xff]
          %v1279 = vld [vmem:[#allocation2 + $0x98] sm:$0xff]
          %v1280 = vld [vmem:[#allocation2 + $0xa0] sm:$0xff]
          %v1281 = vld [vmem:[#allocation2 + $0xa8] sm:$0xff]
          %v1282 = vld [vmem:[#allocation2 + $0xb0] sm:$0xff]
          %v1283 = vld [vmem:[#allocation2 + $0xb8] sm:$0xff]
          %v1284 = vld [vmem:[#allocation2 + $0xc0] sm:$0xff]
          %v1285 = vld [vmem:[#allocation2 + $0xc8] sm:$0xff]
          %v1286 = vld [vmem:[#allocation2 + $0xd0] sm:$0xff]
          %v1287 = vld [vmem:[#allocation2 + $0xd8] sm:$0xff]
          %v1288 = vld [vmem:[#allocation2 + $0xe0] sm:$0xff]
          %v1289 = vld [vmem:[#allocation2 + $0xe8] sm:$0xff]
          %v1290 = vld [vmem:[#allocation2 + $0xf0] sm:$0xff]
          %v1291 = vld [vmem:[#allocation2 + $0xf8] sm:$0xff]
          %v1292 = vld [vmem:[#allocation2 + $0x100] sm:$0xff]
          %v1293 = vld [vmem:[#allocation2 + $0x108] sm:$0xff]
          %v1294 = vld [vmem:[#allocation2 + $0x110] sm:$0xff]
          %v1295 = vld [vmem:[#allocation2 + $0x118] sm:$0xff]
          %v1296 = vld [vmem:[#allocation2 + $0x120] sm:$0xff]
          %v1297 = vld [vmem:[#allocation2 + $0x128] sm:$0xff]
          %v1298 = vld [vmem:[#allocation2 + $0x130] sm:$0xff]
          %v1299 = vld [vmem:[#allocation2 + $0x138] sm:$0xff]
          %v1300 = vld [vmem:[#allocation2 + $0x140] sm:$0xff]
          %v1301 = vld [vmem:[#allocation2 + $0x148] sm:$0xff]
          %v1302 = vld [vmem:[#allocation2 + $0x150] sm:$0xff]
          %v1303 = vld [vmem:[#allocation2 + $0x158] sm:$0xff]
          %v1304 = vld [vmem:[#allocation2 + $0x160] sm:$0xff]
          %v1305 = vld [vmem:[#allocation2 + $0x168] sm:$0xff]
          %v1306 = vld [vmem:[#allocation2 + $0x170] sm:$0xff]
          %v1307 = vld [vmem:[#allocation2 + $0x178] sm:$0xff]
          %v1308 = vld [vmem:[#allocation2 + $0x180] sm:$0xff]
          %v1309 = vld [vmem:[#allocation2 + $0x188] sm:$0xff]
          %v1310 = vld [vmem:[#allocation2 + $0x190] sm:$0xff]
          %v1311 = vld [vmem:[#allocation2 + $0x198] sm:$0xff]
          %v1312 = vld [vmem:[#allocation2 + $0x1a0] sm:$0xff]
          %v1313 = vld [vmem:[#allocation2 + $0x1a8] sm:$0xff]
          %v1314 = vld [vmem:[#allocation2 + $0x1b0] sm:$0xff]
          %v1315 = vld [vmem:[#allocation2 + $0x1b8] sm:$0xff]
          %v1316 = vld [vmem:[#allocation2 + $0x1c0] sm:$0xff]
          %v1317 = vld [vmem:[#allocation2 + $0x1c8] sm:$0xff]
          %v1318 = vld [vmem:[#allocation2 + $0x1d0] sm:$0xff]
          %v1319 = vld [vmem:[#allocation2 + $0x1d8] sm:$0xff]
          %v1320 = vld [vmem:[#allocation2 + $0x1e0] sm:$0xff]
          %v1321 = vld [vmem:[#allocation2 + $0x1e8] sm:$0xff]
          %v1322 = vld [vmem:[#allocation2 + $0x1f0] sm:$0xff]
          %v1323 = vld [vmem:[#allocation2 + $0x1f8] sm:$0xff]
          %v1324 = vld [vmem:[%s414] sm:$0x3]
          %v1326 = vlaneseq
          %v1327 = vshrl.u32 %v1326, 7
          %v1328 = vsub.s32 0, %v1327
          %v1329 = vrot.slane %v1324, %v1328
          %v1330 = vlaneseq
          %v1331 = vshrl.u32 %v1330, 7
          %v1332 = vsub.s32 1, %v1331
          %v1333 = vrot.slane %v1324, %v1332
          %v1336 = vadd.f32 %v1260, %v1329
          %v1337 = vadd.f32 %v1261, %v1333
          %v1338 = vadd.f32 %v1262, %v1329
          %v1339 = vadd.f32 %v1263, %v1333
          %v1340 = vadd.f32 %v1264, %v1329
          %v1341 = vadd.f32 %v1265, %v1333
          %v1342 = vadd.f32 %v1266, %v1329
          %v1343 = vadd.f32 %v1267, %v1333
          %v1344 = vadd.f32 %v1268, %v1329
          %v1345 = vadd.f32 %v1269, %v1333
          %v1346 = vadd.f32 %v1270, %v1329
          %v1347 = vadd.f32 %v1271, %v1333
          %v1348 = vadd.f32 %v1272, %v1329
          %v1349 = vadd.f32 %v1273, %v1333
          %v1350 = vadd.f32 %v1274, %v1329
          %v1351 = vadd.f32 %v1275, %v1333
          %v1352 = vadd.f32 %v1276, %v1329
          %v1353 = vadd.f32 %v1277, %v1333
          %v1354 = vadd.f32 %v1278, %v1329
          %v1355 = vadd.f32 %v1279, %v1333
          %v1356 = vadd.f32 %v1280, %v1329
          %v1357 = vadd.f32 %v1281, %v1333
          %v1358 = vadd.f32 %v1282, %v1329
          %v1359 = vadd.f32 %v1283, %v1333
          %v1360 = vadd.f32 %v1284, %v1329
          %v1361 = vadd.f32 %v1285, %v1333
          %v1362 = vadd.f32 %v1286, %v1329
          %v1363 = vadd.f32 %v1287, %v1333
          %v1364 = vadd.f32 %v1288, %v1329
          %v1365 = vadd.f32 %v1289, %v1333
          %v1366 = vadd.f32 %v1290, %v1329
          %v1367 = vadd.f32 %v1291, %v1333
          %v1368 = vadd.f32 %v1292, %v1329
          %v1369 = vadd.f32 %v1293, %v1333
          %v1370 = vadd.f32 %v1294, %v1329
          %v1371 = vadd.f32 %v1295, %v1333
          %v1372 = vadd.f32 %v1296, %v1329
          %v1373 = vadd.f32 %v1297, %v1333
          %v1374 = vadd.f32 %v1298, %v1329
          %v1375 = vadd.f32 %v1299, %v1333
          %v1376 = vadd.f32 %v1300, %v1329
          %v1377 = vadd.f32 %v1301, %v1333
          %v1378 = vadd.f32 %v1302, %v1329
          %v1379 = vadd.f32 %v1303, %v1333
          %v1380 = vadd.f32 %v1304, %v1329
          %v1381 = vadd.f32 %v1305, %v1333
          %v1382 = vadd.f32 %v1306, %v1329
          %v1383 = vadd.f32 %v1307, %v1333
          %v1384 = vadd.f32 %v1308, %v1329
          %v1385 = vadd.f32 %v1309, %v1333
          %v1386 = vadd.f32 %v1310, %v1329
          %v1387 = vadd.f32 %v1311, %v1333
          %v1388 = vadd.f32 %v1312, %v1329
          %v1389 = vadd.f32 %v1313, %v1333
          %v1390 = vadd.f32 %v1314, %v1329
          %v1391 = vadd.f32 %v1315, %v1333
          %v1392 = vadd.f32 %v1316, %v1329
          %v1393 = vadd.f32 %v1317, %v1333
          %v1394 = vadd.f32 %v1318, %v1329
          %v1395 = vadd.f32 %v1319, %v1333
          %v1396 = vadd.f32 %v1320, %v1329
          %v1397 = vadd.f32 %v1321, %v1333
          %v1398 = vadd.f32 %v1322, %v1329
          %v1399 = vadd.f32 %v1323, %v1333
          %p1400 = scmp.lt.s32.totalorder %s34, 1
          %p1401 = scmp.ge.s32.totalorder %s34, 1
          %p1402 = scmp.lt.s32.totalorder %s34, 2
          %p1403 = pnand %p1401, %p1402
          %p1404 = pneg %p1403
          %p1405 = por %p1400, %p1404
          // Predicated region
          $region65: #{tpu_custom_call.1} parent=63 // pred_check
            %p1406 = pneg %p1405
          $region66: #{tpu_custom_call.1} parent=63 // pred_check_branch
            %1408 = sbr.rel (%p1406) target = $region68
          $region67: #{tpu_custom_call.1} parent=63 // pred_region
            %v1409 = vld [vmem:[%s352] sm:$0xff]
            %v1410 = vld [vmem:[%s352 + $0x8] sm:$0xff]
            %v1411 = vld [vmem:[%s352 + $0x10] sm:$0xff]
            %v1412 = vld [vmem:[%s352 + $0x18] sm:$0xff]
            %v1413 = vld [vmem:[%s352 + $0x20] sm:$0xff]
            %v1414 = vld [vmem:[%s352 + $0x28] sm:$0xff]
            %v1415 = vld [vmem:[%s352 + $0x30] sm:$0xff]
            %v1416 = vld [vmem:[%s352 + $0x38] sm:$0xff]
            %v1417 = vld [vmem:[%s352 + $0x40] sm:$0xff]
            %v1418 = vld [vmem:[%s352 + $0x48] sm:$0xff]
            %v1419 = vld [vmem:[%s352 + $0x50] sm:$0xff]
            %v1420 = vld [vmem:[%s352 + $0x58] sm:$0xff]
            %v1421 = vld [vmem:[%s352 + $0x60] sm:$0xff]
            %v1422 = vld [vmem:[%s352 + $0x68] sm:$0xff]
            %v1423 = vld [vmem:[%s352 + $0x70] sm:$0xff]
            %v1424 = vld [vmem:[%s352 + $0x78] sm:$0xff]
            %v1425 = vld [vmem:[%s352 + $0x80] sm:$0xff]
            %v1426 = vld [vmem:[%s352 + $0x88] sm:$0xff]
            %v1427 = vld [vmem:[%s352 + $0x90] sm:$0xff]
            %v1428 = vld [vmem:[%s352 + $0x98] sm:$0xff]
            %v1429 = vld [vmem:[%s352 + $0xa0] sm:$0xff]
            %v1430 = vld [vmem:[%s352 + $0xa8] sm:$0xff]
            %v1431 = vld [vmem:[%s352 + $0xb0] sm:$0xff]
            %v1432 = vld [vmem:[%s352 + $0xb8] sm:$0xff]
            %v1433 = vld [vmem:[%s352 + $0xc0] sm:$0xff]
            %v1434 = vld [vmem:[%s352 + $0xc8] sm:$0xff]
            %v1435 = vld [vmem:[%s352 + $0xd0] sm:$0xff]
            %v1436 = vld [vmem:[%s352 + $0xd8] sm:$0xff]
            %v1437 = vld [vmem:[%s352 + $0xe0] sm:$0xff]
            %v1438 = vld [vmem:[%s352 + $0xe8] sm:$0xff]
            %v1439 = vld [vmem:[%s352 + $0xf0] sm:$0xff]
            %v1440 = vld [vmem:[%s352 + $0xf8] sm:$0xff]
            %v1441 = vunpack.c.l.bf16 %v1409
            %v1442 = vunpack.c.h.bf16 %v1409
            %v1443 = vunpack.c.l.bf16 %v1410
            %v1444 = vunpack.c.h.bf16 %v1410
            %v1445 = vunpack.c.l.bf16 %v1411
            %v1446 = vunpack.c.h.bf16 %v1411
            %v1447 = vunpack.c.l.bf16 %v1412
            %v1448 = vunpack.c.h.bf16 %v1412
            %v1449 = vunpack.c.l.bf16 %v1413
            %v1450 = vunpack.c.h.bf16 %v1413
            %v1451 = vunpack.c.l.bf16 %v1414
            %v1452 = vunpack.c.h.bf16 %v1414
            %v1453 = vunpack.c.l.bf16 %v1415
            %v1454 = vunpack.c.h.bf16 %v1415
            %v1455 = vunpack.c.l.bf16 %v1416
            %v1456 = vunpack.c.h.bf16 %v1416
            %v1457 = vunpack.c.l.bf16 %v1417
            %v1458 = vunpack.c.h.bf16 %v1417
            %v1459 = vunpack.c.l.bf16 %v1418
            %v1460 = vunpack.c.h.bf16 %v1418
            %v1461 = vunpack.c.l.bf16 %v1419
            %v1462 = vunpack.c.h.bf16 %v1419
            %v1463 = vunpack.c.l.bf16 %v1420
            %v1464 = vunpack.c.h.bf16 %v1420
            %v1465 = vunpack.c.l.bf16 %v1421
            %v1466 = vunpack.c.h.bf16 %v1421
            %v1467 = vunpack.c.l.bf16 %v1422
            %v1468 = vunpack.c.h.bf16 %v1422
            %v1469 = vunpack.c.l.bf16 %v1423
            %v1470 = vunpack.c.h.bf16 %v1423
            %v1471 = vunpack.c.l.bf16 %v1424
            %v1472 = vunpack.c.h.bf16 %v1424
            %v1473 = vunpack.c.l.bf16 %v1425
            %v1474 = vunpack.c.h.bf16 %v1425
            %v1475 = vunpack.c.l.bf16 %v1426
            %v1476 = vunpack.c.h.bf16 %v1426
            %v1477 = vunpack.c.l.bf16 %v1427
            %v1478 = vunpack.c.h.bf16 %v1427
            %v1479 = vunpack.c.l.bf16 %v1428
            %v1480 = vunpack.c.h.bf16 %v1428
            %v1481 = vunpack.c.l.bf16 %v1429
            %v1482 = vunpack.c.h.bf16 %v1429
            %v1483 = vunpack.c.l.bf16 %v1430
            %v1484 = vunpack.c.h.bf16 %v1430
            %v1485 = vunpack.c.l.bf16 %v1431
            %v1486 = vunpack.c.h.bf16 %v1431
            %v1487 = vunpack.c.l.bf16 %v1432
            %v1488 = vunpack.c.h.bf16 %v1432
            %v1489 = vunpack.c.l.bf16 %v1433
            %v1490 = vunpack.c.h.bf16 %v1433
            %v1491 = vunpack.c.l.bf16 %v1434
            %v1492 = vunpack.c.h.bf16 %v1434
            %v1493 = vunpack.c.l.bf16 %v1435
            %v1494 = vunpack.c.h.bf16 %v1435
            %v1495 = vunpack.c.l.bf16 %v1436
            %v1496 = vunpack.c.h.bf16 %v1436
            %v1497 = vunpack.c.l.bf16 %v1437
            %v1498 = vunpack.c.h.bf16 %v1437
            %v1499 = vunpack.c.l.bf16 %v1438
            %v1500 = vunpack.c.h.bf16 %v1438
            %v1501 = vunpack.c.l.bf16 %v1439
            %v1502 = vunpack.c.h.bf16 %v1439
            %v1503 = vunpack.c.l.bf16 %v1440
            %v1504 = vunpack.c.h.bf16 %v1440
            %v1505 = vld [vmem:[%s361] sm:$0xff]
            %v1506 = vld [vmem:[%s361 + $0x8] sm:$0xff]
            %v1507 = vld [vmem:[%s361 + $0x10] sm:$0xff]
            %v1508 = vld [vmem:[%s361 + $0x18] sm:$0xff]
            %v1509 = vld [vmem:[%s361 + $0x20] sm:$0xff]
            %v1510 = vld [vmem:[%s361 + $0x28] sm:$0xff]
            %v1511 = vld [vmem:[%s361 + $0x30] sm:$0xff]
            %v1512 = vld [vmem:[%s361 + $0x38] sm:$0xff]
            %v1513 = vld [vmem:[%s361 + $0x40] sm:$0xff]
            %v1514 = vld [vmem:[%s361 + $0x48] sm:$0xff]
            %v1515 = vld [vmem:[%s361 + $0x50] sm:$0xff]
            %v1516 = vld [vmem:[%s361 + $0x58] sm:$0xff]
            %v1517 = vld [vmem:[%s361 + $0x60] sm:$0xff]
            %v1518 = vld [vmem:[%s361 + $0x68] sm:$0xff]
            %v1519 = vld [vmem:[%s361 + $0x70] sm:$0xff]
            %v1520 = vld [vmem:[%s361 + $0x78] sm:$0xff]
            %v1521 = vld [vmem:[%s361 + $0x80] sm:$0xff]
            %v1522 = vld [vmem:[%s361 + $0x88] sm:$0xff]
            %v1523 = vld [vmem:[%s361 + $0x90] sm:$0xff]
            %v1524 = vld [vmem:[%s361 + $0x98] sm:$0xff]
            %v1525 = vld [vmem:[%s361 + $0xa0] sm:$0xff]
            %v1526 = vld [vmem:[%s361 + $0xa8] sm:$0xff]
            %v1527 = vld [vmem:[%s361 + $0xb0] sm:$0xff]
            %v1528 = vld [vmem:[%s361 + $0xb8] sm:$0xff]
            %v1529 = vld [vmem:[%s361 + $0xc0] sm:$0xff]
            %v1530 = vld [vmem:[%s361 + $0xc8] sm:$0xff]
            %v1531 = vld [vmem:[%s361 + $0xd0] sm:$0xff]
            %v1532 = vld [vmem:[%s361 + $0xd8] sm:$0xff]
            %v1533 = vld [vmem:[%s361 + $0xe0] sm:$0xff]
            %v1534 = vld [vmem:[%s361 + $0xe8] sm:$0xff]
            %v1535 = vld [vmem:[%s361 + $0xf0] sm:$0xff]
            %v1536 = vld [vmem:[%s361 + $0xf8] sm:$0xff]
            %v1537 = vunpack.c.l.bf16 %v1505
            %v1538 = vunpack.c.h.bf16 %v1505
            %v1539 = vunpack.c.l.bf16 %v1506
            %v1540 = vunpack.c.h.bf16 %v1506
            %v1541 = vunpack.c.l.bf16 %v1507
            %v1542 = vunpack.c.h.bf16 %v1507
            %v1543 = vunpack.c.l.bf16 %v1508
            %v1544 = vunpack.c.h.bf16 %v1508
            %v1545 = vunpack.c.l.bf16 %v1509
            %v1546 = vunpack.c.h.bf16 %v1509
            %v1547 = vunpack.c.l.bf16 %v1510
            %v1548 = vunpack.c.h.bf16 %v1510
            %v1549 = vunpack.c.l.bf16 %v1511
            %v1550 = vunpack.c.h.bf16 %v1511
            %v1551 = vunpack.c.l.bf16 %v1512
            %v1552 = vunpack.c.h.bf16 %v1512
            %v1553 = vunpack.c.l.bf16 %v1513
            %v1554 = vunpack.c.h.bf16 %v1513
            %v1555 = vunpack.c.l.bf16 %v1514
            %v1556 = vunpack.c.h.bf16 %v1514
            %v1557 = vunpack.c.l.bf16 %v1515
            %v1558 = vunpack.c.h.bf16 %v1515
            %v1559 = vunpack.c.l.bf16 %v1516
            %v1560 = vunpack.c.h.bf16 %v1516
            %v1561 = vunpack.c.l.bf16 %v1517
            %v1562 = vunpack.c.h.bf16 %v1517
            %v1563 = vunpack.c.l.bf16 %v1518
            %v1564 = vunpack.c.h.bf16 %v1518
            %v1565 = vunpack.c.l.bf16 %v1519
            %v1566 = vunpack.c.h.bf16 %v1519
            %v1567 = vunpack.c.l.bf16 %v1520
            %v1568 = vunpack.c.h.bf16 %v1520
            %v1569 = vunpack.c.l.bf16 %v1521
            %v1570 = vunpack.c.h.bf16 %v1521
            %v1571 = vunpack.c.l.bf16 %v1522
            %v1572 = vunpack.c.h.bf16 %v1522
            %v1573 = vunpack.c.l.bf16 %v1523
            %v1574 = vunpack.c.h.bf16 %v1523
            %v1575 = vunpack.c.l.bf16 %v1524
            %v1576 = vunpack.c.h.bf16 %v1524
            %v1577 = vunpack.c.l.bf16 %v1525
            %v1578 = vunpack.c.h.bf16 %v1525
            %v1579 = vunpack.c.l.bf16 %v1526
            %v1580 = vunpack.c.h.bf16 %v1526
            %v1581 = vunpack.c.l.bf16 %v1527
            %v1582 = vunpack.c.h.bf16 %v1527
            %v1583 = vunpack.c.l.bf16 %v1528
            %v1584 = vunpack.c.h.bf16 %v1528
            %v1585 = vunpack.c.l.bf16 %v1529
            %v1586 = vunpack.c.h.bf16 %v1529
            %v1587 = vunpack.c.l.bf16 %v1530
            %v1588 = vunpack.c.h.bf16 %v1530
            %v1589 = vunpack.c.l.bf16 %v1531
            %v1590 = vunpack.c.h.bf16 %v1531
            %v1591 = vunpack.c.l.bf16 %v1532
            %v1592 = vunpack.c.h.bf16 %v1532
            %v1593 = vunpack.c.l.bf16 %v1533
            %v1594 = vunpack.c.h.bf16 %v1533
            %v1595 = vunpack.c.l.bf16 %v1534
            %v1596 = vunpack.c.h.bf16 %v1534
            %v1597 = vunpack.c.l.bf16 %v1535
            %v1598 = vunpack.c.h.bf16 %v1535
            %v1599 = vunpack.c.l.bf16 %v1536
            %v1600 = vunpack.c.h.bf16 %v1536
            %s1601 = scalar_select %p1400, 0.088388346, 1.0
            %1602 = vrot.lane.b32.xlu0 %v1336, 64
            %v1603 = vpop.permute.xlu0 %1602
            %1604 = vrot.lane.b32.xlu0 %v1338, 64
            %v1605 = vpop.permute.xlu0 %1604
            %1606 = vrot.lane.b32.xlu0 %v1340, 64
            %v1607 = vpop.permute.xlu0 %1606
            %1608 = vrot.lane.b32.xlu0 %v1342, 64
            %v1609 = vpop.permute.xlu0 %1608
            %1610 = vrot.lane.b32.xlu0 %v1344, 64
            %v1611 = vpop.permute.xlu0 %1610
            %1612 = vrot.lane.b32.xlu0 %v1346, 64
            %v1613 = vpop.permute.xlu0 %1612
            %1614 = vrot.lane.b32.xlu0 %v1348, 64
            %v1615 = vpop.permute.xlu0 %1614
            %1616 = vrot.lane.b32.xlu0 %v1350, 64
            %v1617 = vpop.permute.xlu0 %1616
            %1618 = vrot.lane.b32.xlu0 %v1352, 64
            %v1619 = vpop.permute.xlu0 %1618
            %1620 = vrot.lane.b32.xlu0 %v1354, 64
            %v1621 = vpop.permute.xlu0 %1620
            %1622 = vrot.lane.b32.xlu0 %v1356, 64
            %v1623 = vpop.permute.xlu0 %1622
            %1624 = vrot.lane.b32.xlu0 %v1358, 64
            %v1625 = vpop.permute.xlu0 %1624
            %1626 = vrot.lane.b32.xlu0 %v1360, 64
            %v1627 = vpop.permute.xlu0 %1626
            %1628 = vrot.lane.b32.xlu0 %v1362, 64
            %v1629 = vpop.permute.xlu0 %1628
            %1630 = vrot.lane.b32.xlu0 %v1364, 64
            %v1631 = vpop.permute.xlu0 %1630
            %1632 = vrot.lane.b32.xlu0 %v1366, 64
            %v1633 = vpop.permute.xlu0 %1632
            %1634 = vrot.lane.b32.xlu0 %v1368, 64
            %v1635 = vpop.permute.xlu0 %1634
            %1636 = vrot.lane.b32.xlu0 %v1370, 64
            %v1637 = vpop.permute.xlu0 %1636
            %1638 = vrot.lane.b32.xlu0 %v1372, 64
            %v1639 = vpop.permute.xlu0 %1638
            %1640 = vrot.lane.b32.xlu0 %v1374, 64
            %v1641 = vpop.permute.xlu0 %1640
            %1642 = vrot.lane.b32.xlu0 %v1376, 64
            %v1643 = vpop.permute.xlu0 %1642
            %1644 = vrot.lane.b32.xlu0 %v1378, 64
            %v1645 = vpop.permute.xlu0 %1644
            %1646 = vrot.lane.b32.xlu0 %v1380, 64
            %v1647 = vpop.permute.xlu0 %1646
            %1648 = vrot.lane.b32.xlu0 %v1382, 64
            %v1649 = vpop.permute.xlu0 %1648
            %1650 = vrot.lane.b32.xlu0 %v1384, 64
            %v1651 = vpop.permute.xlu0 %1650
            %1652 = vrot.lane.b32.xlu0 %v1386, 64
            %v1653 = vpop.permute.xlu0 %1652
            %1654 = vrot.lane.b32.xlu0 %v1388, 64
            %v1655 = vpop.permute.xlu0 %1654
            %1656 = vrot.lane.b32.xlu0 %v1390, 64
            %v1657 = vpop.permute.xlu0 %1656
            %1658 = vrot.lane.b32.xlu0 %v1392, 64
            %v1659 = vpop.permute.xlu0 %1658
            %1660 = vrot.lane.b32.xlu0 %v1394, 64
            %v1661 = vpop.permute.xlu0 %1660
            %1662 = vrot.lane.b32.xlu0 %v1396, 64
            %v1663 = vpop.permute.xlu0 %1662
            %1664 = vrot.lane.b32.xlu0 %v1398, 64
            %v1665 = vpop.permute.xlu0 %1664
            %v1666 = vmul.f32 %v1336, %v1441
            %v1667 = vmul.f32 %v1338, %v1443
            %v1668 = vmul.f32 %v1340, %v1445
            %v1669 = vmul.f32 %v1342, %v1447
            %v1670 = vmul.f32 %v1344, %v1449
            %v1671 = vmul.f32 %v1346, %v1451
            %v1672 = vmul.f32 %v1348, %v1453
            %v1673 = vmul.f32 %v1350, %v1455
            %v1674 = vmul.f32 %v1352, %v1457
            %v1675 = vmul.f32 %v1354, %v1459
            %v1676 = vmul.f32 %v1356, %v1461
            %v1677 = vmul.f32 %v1358, %v1463
            %v1678 = vmul.f32 %v1360, %v1465
            %v1679 = vmul.f32 %v1362, %v1467
            %v1680 = vmul.f32 %v1364, %v1469
            %v1681 = vmul.f32 %v1366, %v1471
            %v1682 = vmul.f32 %v1368, %v1473
            %v1683 = vmul.f32 %v1370, %v1475
            %v1684 = vmul.f32 %v1372, %v1477
            %v1685 = vmul.f32 %v1374, %v1479
            %v1686 = vmul.f32 %v1376, %v1481
            %v1687 = vmul.f32 %v1378, %v1483
            %v1688 = vmul.f32 %v1380, %v1485
            %v1689 = vmul.f32 %v1382, %v1487
            %v1690 = vmul.f32 %v1384, %v1489
            %v1691 = vmul.f32 %v1386, %v1491
            %v1692 = vmul.f32 %v1388, %v1493
            %v1693 = vmul.f32 %v1390, %v1495
            %v1694 = vmul.f32 %v1392, %v1497
            %v1695 = vmul.f32 %v1394, %v1499
            %v1696 = vmul.f32 %v1396, %v1501
            %v1697 = vmul.f32 %v1398, %v1503
            %v1698 = vmul.f32 %v1603, %v1537
            %v1699 = vmul.f32 %v1605, %v1539
            %v1700 = vmul.f32 %v1607, %v1541
            %v1701 = vmul.f32 %v1609, %v1543
            %v1702 = vmul.f32 %v1611, %v1545
            %v1703 = vmul.f32 %v1613, %v1547
            %v1704 = vmul.f32 %v1615, %v1549
            %v1705 = vmul.f32 %v1617, %v1551
            %v1706 = vmul.f32 %v1619, %v1553
            %v1707 = vmul.f32 %v1621, %v1555
            %v1708 = vmul.f32 %v1623, %v1557
            %v1709 = vmul.f32 %v1625, %v1559
            %v1710 = vmul.f32 %v1627, %v1561
            %v1711 = vmul.f32 %v1629, %v1563
            %v1712 = vmul.f32 %v1631, %v1565
            %v1713 = vmul.f32 %v1633, %v1567
            %v1714 = vmul.f32 %v1635, %v1569
            %v1715 = vmul.f32 %v1637, %v1571
            %v1716 = vmul.f32 %v1639, %v1573
            %v1717 = vmul.f32 %v1641, %v1575
            %v1718 = vmul.f32 %v1643, %v1577
            %v1719 = vmul.f32 %v1645, %v1579
            %v1720 = vmul.f32 %v1647, %v1581
            %v1721 = vmul.f32 %v1649, %v1583
            %v1722 = vmul.f32 %v1651, %v1585
            %v1723 = vmul.f32 %v1653, %v1587
            %v1724 = vmul.f32 %v1655, %v1589
            %v1725 = vmul.f32 %v1657, %v1591
            %v1726 = vmul.f32 %v1659, %v1593
            %v1727 = vmul.f32 %v1661, %v1595
            %v1728 = vmul.f32 %v1663, %v1597
            %v1729 = vmul.f32 %v1665, %v1599
            %v1730 = vadd.f32 %v1666, %v1698
            %v1731 = vadd.f32 %v1667, %v1699
            %v1732 = vadd.f32 %v1668, %v1700
            %v1733 = vadd.f32 %v1669, %v1701
            %v1734 = vadd.f32 %v1670, %v1702
            %v1735 = vadd.f32 %v1671, %v1703
            %v1736 = vadd.f32 %v1672, %v1704
            %v1737 = vadd.f32 %v1673, %v1705
            %v1738 = vadd.f32 %v1674, %v1706
            %v1739 = vadd.f32 %v1675, %v1707
            %v1740 = vadd.f32 %v1676, %v1708
            %v1741 = vadd.f32 %v1677, %v1709
            %v1742 = vadd.f32 %v1678, %v1710
            %v1743 = vadd.f32 %v1679, %v1711
            %v1744 = vadd.f32 %v1680, %v1712
            %v1745 = vadd.f32 %v1681, %v1713
            %v1746 = vadd.f32 %v1682, %v1714
            %v1747 = vadd.f32 %v1683, %v1715
            %v1748 = vadd.f32 %v1684, %v1716
            %v1749 = vadd.f32 %v1685, %v1717
            %v1750 = vadd.f32 %v1686, %v1718
            %v1751 = vadd.f32 %v1687, %v1719
            %v1752 = vadd.f32 %v1688, %v1720
            %v1753 = vadd.f32 %v1689, %v1721
            %v1754 = vadd.f32 %v1690, %v1722
            %v1755 = vadd.f32 %v1691, %v1723
            %v1756 = vadd.f32 %v1692, %v1724
            %v1757 = vadd.f32 %v1693, %v1725
            %v1758 = vadd.f32 %v1694, %v1726
            %v1759 = vadd.f32 %v1695, %v1727
            %v1760 = vadd.f32 %v1696, %v1728
            %v1761 = vadd.f32 %v1697, %v1729
            %v1762 = vstv %s1601
            %v1763 = vmul.f32 %v1730, %v1762
            %v1764 = vmul.f32 %v1731, %v1762
            %v1765 = vmul.f32 %v1732, %v1762
            %v1766 = vmul.f32 %v1733, %v1762
            %v1767 = vmul.f32 %v1734, %v1762
            %v1768 = vmul.f32 %v1735, %v1762
            %v1769 = vmul.f32 %v1736, %v1762
            %v1770 = vmul.f32 %v1737, %v1762
            %v1771 = vmul.f32 %v1738, %v1762
            %v1772 = vmul.f32 %v1739, %v1762
            %v1773 = vmul.f32 %v1740, %v1762
            %v1774 = vmul.f32 %v1741, %v1762
            %v1775 = vmul.f32 %v1742, %v1762
            %v1776 = vmul.f32 %v1743, %v1762
            %v1777 = vmul.f32 %v1744, %v1762
            %v1778 = vmul.f32 %v1745, %v1762
            %v1779 = vmul.f32 %v1746, %v1762
            %v1780 = vmul.f32 %v1747, %v1762
            %v1781 = vmul.f32 %v1748, %v1762
            %v1782 = vmul.f32 %v1749, %v1762
            %v1783 = vmul.f32 %v1750, %v1762
            %v1784 = vmul.f32 %v1751, %v1762
            %v1785 = vmul.f32 %v1752, %v1762
            %v1786 = vmul.f32 %v1753, %v1762
            %v1787 = vmul.f32 %v1754, %v1762
            %v1788 = vmul.f32 %v1755, %v1762
            %v1789 = vmul.f32 %v1756, %v1762
            %v1790 = vmul.f32 %v1757, %v1762
            %v1791 = vmul.f32 %v1758, %v1762
            %v1792 = vmul.f32 %v1759, %v1762
            %v1793 = vmul.f32 %v1760, %v1762
            %v1794 = vmul.f32 %v1761, %v1762
            %v1795 = vpack.c.bf16 %v1764, %v1763
            %v1796 = vpack.c.bf16 %v1766, %v1765
            %v1797 = vpack.c.bf16 %v1768, %v1767
            %v1798 = vpack.c.bf16 %v1770, %v1769
            %v1799 = vpack.c.bf16 %v1772, %v1771
            %v1800 = vpack.c.bf16 %v1774, %v1773
            %v1801 = vpack.c.bf16 %v1776, %v1775
            %v1802 = vpack.c.bf16 %v1778, %v1777
            %v1803 = vpack.c.bf16 %v1780, %v1779
            %v1804 = vpack.c.bf16 %v1782, %v1781
            %v1805 = vpack.c.bf16 %v1784, %v1783
            %v1806 = vpack.c.bf16 %v1786, %v1785
            %v1807 = vpack.c.bf16 %v1788, %v1787
            %v1808 = vpack.c.bf16 %v1790, %v1789
            %v1809 = vpack.c.bf16 %v1792, %v1791
            %v1810 = vpack.c.bf16 %v1794, %v1793
            %v1827 = vunpack.c.l.b16 %v1795
            %v1828 = vunpack.c.h.b16 %v1795
            %v1829 = vunpack.c.l.b16 %v1796
            %v1830 = vunpack.c.h.b16 %v1796
            %v1831 = vunpack.c.l.b16 %v1797
            %v1832 = vunpack.c.h.b16 %v1797
            %v1833 = vunpack.c.l.b16 %v1798
            %v1834 = vunpack.c.h.b16 %v1798
            %v1835 = vunpack.c.l.b16 %v1799
            %v1836 = vunpack.c.h.b16 %v1799
            %v1837 = vunpack.c.l.b16 %v1800
            %v1838 = vunpack.c.h.b16 %v1800
            %v1839 = vunpack.c.l.b16 %v1801
            %v1840 = vunpack.c.h.b16 %v1801
            %v1841 = vunpack.c.l.b16 %v1802
            %v1842 = vunpack.c.h.b16 %v1802
            %v1843 = vunpack.c.l.b16 %v1803
            %v1844 = vunpack.c.h.b16 %v1803
            %v1845 = vunpack.c.l.b16 %v1804
            %v1846 = vunpack.c.h.b16 %v1804
            %v1847 = vunpack.c.l.b16 %v1805
            %v1848 = vunpack.c.h.b16 %v1805
            %v1849 = vunpack.c.l.b16 %v1806
            %v1850 = vunpack.c.h.b16 %v1806
            %v1851 = vunpack.c.l.b16 %v1807
            %v1852 = vunpack.c.h.b16 %v1807
            %v1853 = vunpack.c.l.b16 %v1808
            %v1854 = vunpack.c.h.b16 %v1808
            %v1855 = vunpack.c.l.b16 %v1809
            %v1856 = vunpack.c.h.b16 %v1809
            %v1857 = vunpack.c.l.b16 %v1810
            %v1858 = vunpack.c.h.b16 %v1810
            %v1859 = vpack.c.b16 %v1827, %v1827
            %v1860 = vpack.c.b16 %v1828, %v1828
            %v1861 = vpack.c.b16 %v1829, %v1829
            %v1862 = vpack.c.b16 %v1830, %v1830
            %v1863 = vpack.c.b16 %v1831, %v1831
            %v1864 = vpack.c.b16 %v1832, %v1832
            %v1865 = vpack.c.b16 %v1833, %v1833
            %v1866 = vpack.c.b16 %v1834, %v1834
            %v1867 = vpack.c.b16 %v1835, %v1835
            %v1868 = vpack.c.b16 %v1836, %v1836
            %v1869 = vpack.c.b16 %v1837, %v1837
            %v1870 = vpack.c.b16 %v1838, %v1838
            %v1871 = vpack.c.b16 %v1839, %v1839
            %v1872 = vpack.c.b16 %v1840, %v1840
            %v1873 = vpack.c.b16 %v1841, %v1841
            %v1874 = vpack.c.b16 %v1842, %v1842
            %v1875 = vpack.c.b16 %v1843, %v1843
            %v1876 = vpack.c.b16 %v1844, %v1844
            %v1877 = vpack.c.b16 %v1845, %v1845
            %v1878 = vpack.c.b16 %v1846, %v1846
            %v1879 = vpack.c.b16 %v1847, %v1847
            %v1880 = vpack.c.b16 %v1848, %v1848
            %v1881 = vpack.c.b16 %v1849, %v1849
            %v1882 = vpack.c.b16 %v1850, %v1850
            %v1883 = vpack.c.b16 %v1851, %v1851
            %v1884 = vpack.c.b16 %v1852, %v1852
            %v1885 = vpack.c.b16 %v1853, %v1853
            %v1886 = vpack.c.b16 %v1854, %v1854
            %v1887 = vpack.c.b16 %v1855, %v1855
            %v1888 = vpack.c.b16 %v1856, %v1856
            %v1889 = vpack.c.b16 %v1857, %v1857
            %v1890 = vpack.c.b16 %v1858, %v1858
            %1923 = vst [vmem:[%s406] sm:$0xf] %v1859
            %1924 = vst [vmem:[%s406 + $0x8] sm:$0xf] %v1860
            %1925 = vst [vmem:[%s406 + $0x10] sm:$0xf] %v1861
            %1926 = vst [vmem:[%s406 + $0x18] sm:$0xf] %v1862
            %1927 = vst [vmem:[%s406 + $0x20] sm:$0xf] %v1863
            %1928 = vst [vmem:[%s406 + $0x28] sm:$0xf] %v1864
            %1929 = vst [vmem:[%s406 + $0x30] sm:$0xf] %v1865
            %1930 = vst [vmem:[%s406 + $0x38] sm:$0xf] %v1866
            %1931 = vst [vmem:[%s406 + $0x40] sm:$0xf] %v1867
            %1932 = vst [vmem:[%s406 + $0x48] sm:$0xf] %v1868
            %1933 = vst [vmem:[%s406 + $0x50] sm:$0xf] %v1869
            %1934 = vst [vmem:[%s406 + $0x58] sm:$0xf] %v1870
            %1935 = vst [vmem:[%s406 + $0x60] sm:$0xf] %v1871
            %1936 = vst [vmem:[%s406 + $0x68] sm:$0xf] %v1872
            %1937 = vst [vmem:[%s406 + $0x70] sm:$0xf] %v1873
            %1938 = vst [vmem:[%s406 + $0x78] sm:$0xf] %v1874
            %1939 = vst [vmem:[%s406 + $0x80] sm:$0xf] %v1875
            %1940 = vst [vmem:[%s406 + $0x88] sm:$0xf] %v1876
            %1941 = vst [vmem:[%s406 + $0x90] sm:$0xf] %v1877
            %1942 = vst [vmem:[%s406 + $0x98] sm:$0xf] %v1878
            %1943 = vst [vmem:[%s406 + $0xa0] sm:$0xf] %v1879
            %1944 = vst [vmem:[%s406 + $0xa8] sm:$0xf] %v1880
            %1945 = vst [vmem:[%s406 + $0xb0] sm:$0xf] %v1881
            %1946 = vst [vmem:[%s406 + $0xb8] sm:$0xf] %v1882
            %1947 = vst [vmem:[%s406 + $0xc0] sm:$0xf] %v1883
            %1948 = vst [vmem:[%s406 + $0xc8] sm:$0xf] %v1884
            %1949 = vst [vmem:[%s406 + $0xd0] sm:$0xf] %v1885
            %1950 = vst [vmem:[%s406 + $0xd8] sm:$0xf] %v1886
            %1951 = vst [vmem:[%s406 + $0xe0] sm:$0xf] %v1887
            %1952 = vst [vmem:[%s406 + $0xe8] sm:$0xf] %v1888
            %1953 = vst [vmem:[%s406 + $0xf0] sm:$0xf] %v1889
            %1954 = vst [vmem:[%s406 + $0xf8] sm:$0xf] %v1890
            %1955 = vrot.lane.b32.xlu0 %v1337, 64
            %v1956 = vpop.permute.xlu0 %1955
            %1957 = vrot.lane.b32.xlu0 %v1339, 64
            %v1958 = vpop.permute.xlu0 %1957
            %1959 = vrot.lane.b32.xlu0 %v1341, 64
            %v1960 = vpop.permute.xlu0 %1959
            %1961 = vrot.lane.b32.xlu0 %v1343, 64
            %v1962 = vpop.permute.xlu0 %1961
            %1963 = vrot.lane.b32.xlu0 %v1345, 64
            %v1964 = vpop.permute.xlu0 %1963
            %1965 = vrot.lane.b32.xlu0 %v1347, 64
            %v1966 = vpop.permute.xlu0 %1965
            %1967 = vrot.lane.b32.xlu0 %v1349, 64
            %v1968 = vpop.permute.xlu0 %1967
            %1969 = vrot.lane.b32.xlu0 %v1351, 64
            %v1970 = vpop.permute.xlu0 %1969
            %1971 = vrot.lane.b32.xlu0 %v1353, 64
            %v1972 = vpop.permute.xlu0 %1971
            %1973 = vrot.lane.b32.xlu0 %v1355, 64
            %v1974 = vpop.permute.xlu0 %1973
            %1975 = vrot.lane.b32.xlu0 %v1357, 64
            %v1976 = vpop.permute.xlu0 %1975
            %1977 = vrot.lane.b32.xlu0 %v1359, 64
            %v1978 = vpop.permute.xlu0 %1977
            %1979 = vrot.lane.b32.xlu0 %v1361, 64
            %v1980 = vpop.permute.xlu0 %1979
            %1981 = vrot.lane.b32.xlu0 %v1363, 64
            %v1982 = vpop.permute.xlu0 %1981
            %1983 = vrot.lane.b32.xlu0 %v1365, 64
            %v1984 = vpop.permute.xlu0 %1983
            %1985 = vrot.lane.b32.xlu0 %v1367, 64
            %v1986 = vpop.permute.xlu0 %1985
            %1987 = vrot.lane.b32.xlu0 %v1369, 64
            %v1988 = vpop.permute.xlu0 %1987
            %1989 = vrot.lane.b32.xlu0 %v1371, 64
            %v1990 = vpop.permute.xlu0 %1989
            %1991 = vrot.lane.b32.xlu0 %v1373, 64
            %v1992 = vpop.permute.xlu0 %1991
            %1993 = vrot.lane.b32.xlu0 %v1375, 64
            %v1994 = vpop.permute.xlu0 %1993
            %1995 = vrot.lane.b32.xlu0 %v1377, 64
            %v1996 = vpop.permute.xlu0 %1995
            %1997 = vrot.lane.b32.xlu0 %v1379, 64
            %v1998 = vpop.permute.xlu0 %1997
            %1999 = vrot.lane.b32.xlu0 %v1381, 64
            %v2000 = vpop.permute.xlu0 %1999
            %2001 = vrot.lane.b32.xlu0 %v1383, 64
            %v2002 = vpop.permute.xlu0 %2001
            %2003 = vrot.lane.b32.xlu0 %v1385, 64
            %v2004 = vpop.permute.xlu0 %2003
            %2005 = vrot.lane.b32.xlu0 %v1387, 64
            %v2006 = vpop.permute.xlu0 %2005
            %2007 = vrot.lane.b32.xlu0 %v1389, 64
            %v2008 = vpop.permute.xlu0 %2007
            %2009 = vrot.lane.b32.xlu0 %v1391, 64
            %v2010 = vpop.permute.xlu0 %2009
            %2011 = vrot.lane.b32.xlu0 %v1393, 64
            %v2012 = vpop.permute.xlu0 %2011
            %2013 = vrot.lane.b32.xlu0 %v1395, 64
            %v2014 = vpop.permute.xlu0 %2013
            %2015 = vrot.lane.b32.xlu0 %v1397, 64
            %v2016 = vpop.permute.xlu0 %2015
            %2017 = vrot.lane.b32.xlu0 %v1399, 64
            %v2018 = vpop.permute.xlu0 %2017
            %v2019 = vmul.f32 %v1337, %v1442
            %v2020 = vmul.f32 %v1339, %v1444
            %v2021 = vmul.f32 %v1341, %v1446
            %v2022 = vmul.f32 %v1343, %v1448
            %v2023 = vmul.f32 %v1345, %v1450
            %v2024 = vmul.f32 %v1347, %v1452
            %v2025 = vmul.f32 %v1349, %v1454
            %v2026 = vmul.f32 %v1351, %v1456
            %v2027 = vmul.f32 %v1353, %v1458
            %v2028 = vmul.f32 %v1355, %v1460
            %v2029 = vmul.f32 %v1357, %v1462
            %v2030 = vmul.f32 %v1359, %v1464
            %v2031 = vmul.f32 %v1361, %v1466
            %v2032 = vmul.f32 %v1363, %v1468
            %v2033 = vmul.f32 %v1365, %v1470
            %v2034 = vmul.f32 %v1367, %v1472
            %v2035 = vmul.f32 %v1369, %v1474
            %v2036 = vmul.f32 %v1371, %v1476
            %v2037 = vmul.f32 %v1373, %v1478
            %v2038 = vmul.f32 %v1375, %v1480
            %v2039 = vmul.f32 %v1377, %v1482
            %v2040 = vmul.f32 %v1379, %v1484
            %v2041 = vmul.f32 %v1381, %v1486
            %v2042 = vmul.f32 %v1383, %v1488
            %v2043 = vmul.f32 %v1385, %v1490
            %v2044 = vmul.f32 %v1387, %v1492
            %v2045 = vmul.f32 %v1389, %v1494
            %v2046 = vmul.f32 %v1391, %v1496
            %v2047 = vmul.f32 %v1393, %v1498
            %v2048 = vmul.f32 %v1395, %v1500
            %v2049 = vmul.f32 %v1397, %v1502
            %v2050 = vmul.f32 %v1399, %v1504
            %v2051 = vmul.f32 %v1956, %v1538
            %v2052 = vmul.f32 %v1958, %v1540
            %v2053 = vmul.f32 %v1960, %v1542
            %v2054 = vmul.f32 %v1962, %v1544
            %v2055 = vmul.f32 %v1964, %v1546
            %v2056 = vmul.f32 %v1966, %v1548
            %v2057 = vmul.f32 %v1968, %v1550
            %v2058 = vmul.f32 %v1970, %v1552
            %v2059 = vmul.f32 %v1972, %v1554
            %v2060 = vmul.f32 %v1974, %v1556
            %v2061 = vmul.f32 %v1976, %v1558
            %v2062 = vmul.f32 %v1978, %v1560
            %v2063 = vmul.f32 %v1980, %v1562
            %v2064 = vmul.f32 %v1982, %v1564
            %v2065 = vmul.f32 %v1984, %v1566
            %v2066 = vmul.f32 %v1986, %v1568
            %v2067 = vmul.f32 %v1988, %v1570
            %v2068 = vmul.f32 %v1990, %v1572
            %v2069 = vmul.f32 %v1992, %v1574
            %v2070 = vmul.f32 %v1994, %v1576
            %v2071 = vmul.f32 %v1996, %v1578
            %v2072 = vmul.f32 %v1998, %v1580
            %v2073 = vmul.f32 %v2000, %v1582
            %v2074 = vmul.f32 %v2002, %v1584
            %v2075 = vmul.f32 %v2004, %v1586
            %v2076 = vmul.f32 %v2006, %v1588
            %v2077 = vmul.f32 %v2008, %v1590
            %v2078 = vmul.f32 %v2010, %v1592
            %v2079 = vmul.f32 %v2012, %v1594
            %v2080 = vmul.f32 %v2014, %v1596
            %v2081 = vmul.f32 %v2016, %v1598
            %v2082 = vmul.f32 %v2018, %v1600
            %v2083 = vadd.f32 %v2019, %v2051
            %v2084 = vadd.f32 %v2020, %v2052
            %v2085 = vadd.f32 %v2021, %v2053
            %v2086 = vadd.f32 %v2022, %v2054
            %v2087 = vadd.f32 %v2023, %v2055
            %v2088 = vadd.f32 %v2024, %v2056
            %v2089 = vadd.f32 %v2025, %v2057
            %v2090 = vadd.f32 %v2026, %v2058
            %v2091 = vadd.f32 %v2027, %v2059
            %v2092 = vadd.f32 %v2028, %v2060
            %v2093 = vadd.f32 %v2029, %v2061
            %v2094 = vadd.f32 %v2030, %v2062
            %v2095 = vadd.f32 %v2031, %v2063
            %v2096 = vadd.f32 %v2032, %v2064
            %v2097 = vadd.f32 %v2033, %v2065
            %v2098 = vadd.f32 %v2034, %v2066
            %v2099 = vadd.f32 %v2035, %v2067
            %v2100 = vadd.f32 %v2036, %v2068
            %v2101 = vadd.f32 %v2037, %v2069
            %v2102 = vadd.f32 %v2038, %v2070
            %v2103 = vadd.f32 %v2039, %v2071
            %v2104 = vadd.f32 %v2040, %v2072
            %v2105 = vadd.f32 %v2041, %v2073
            %v2106 = vadd.f32 %v2042, %v2074
            %v2107 = vadd.f32 %v2043, %v2075
            %v2108 = vadd.f32 %v2044, %v2076
            %v2109 = vadd.f32 %v2045, %v2077
            %v2110 = vadd.f32 %v2046, %v2078
            %v2111 = vadd.f32 %v2047, %v2079
            %v2112 = vadd.f32 %v2048, %v2080
            %v2113 = vadd.f32 %v2049, %v2081
            %v2114 = vadd.f32 %v2050, %v2082
            %v2115 = vmul.f32 %v2083, %v1762
            %v2116 = vmul.f32 %v2084, %v1762
            %v2117 = vmul.f32 %v2085, %v1762
            %v2118 = vmul.f32 %v2086, %v1762
            %v2119 = vmul.f32 %v2087, %v1762
            %v2120 = vmul.f32 %v2088, %v1762
            %v2121 = vmul.f32 %v2089, %v1762
            %v2122 = vmul.f32 %v2090, %v1762
            %v2123 = vmul.f32 %v2091, %v1762
            %v2124 = vmul.f32 %v2092, %v1762
            %v2125 = vmul.f32 %v2093, %v1762
            %v2126 = vmul.f32 %v2094, %v1762
            %v2127 = vmul.f32 %v2095, %v1762
            %v2128 = vmul.f32 %v2096, %v1762
            %v2129 = vmul.f32 %v2097, %v1762
            %v2130 = vmul.f32 %v2098, %v1762
            %v2131 = vmul.f32 %v2099, %v1762
            %v2132 = vmul.f32 %v2100, %v1762
            %v2133 = vmul.f32 %v2101, %v1762
            %v2134 = vmul.f32 %v2102, %v1762
            %v2135 = vmul.f32 %v2103, %v1762
            %v2136 = vmul.f32 %v2104, %v1762
            %v2137 = vmul.f32 %v2105, %v1762
            %v2138 = vmul.f32 %v2106, %v1762
            %v2139 = vmul.f32 %v2107, %v1762
            %v2140 = vmul.f32 %v2108, %v1762
            %v2141 = vmul.f32 %v2109, %v1762
            %v2142 = vmul.f32 %v2110, %v1762
            %v2143 = vmul.f32 %v2111, %v1762
            %v2144 = vmul.f32 %v2112, %v1762
            %v2145 = vmul.f32 %v2113, %v1762
            %v2146 = vmul.f32 %v2114, %v1762
            %v2147 = vpack.c.bf16 %v2116, %v2115
            %v2148 = vpack.c.bf16 %v2118, %v2117
            %v2149 = vpack.c.bf16 %v2120, %v2119
            %v2150 = vpack.c.bf16 %v2122, %v2121
            %v2151 = vpack.c.bf16 %v2124, %v2123
            %v2152 = vpack.c.bf16 %v2126, %v2125
            %v2153 = vpack.c.bf16 %v2128, %v2127
            %v2154 = vpack.c.bf16 %v2130, %v2129
            %v2155 = vpack.c.bf16 %v2132, %v2131
            %v2156 = vpack.c.bf16 %v2134, %v2133
            %v2157 = vpack.c.bf16 %v2136, %v2135
            %v2158 = vpack.c.bf16 %v2138, %v2137
            %v2159 = vpack.c.bf16 %v2140, %v2139
            %v2160 = vpack.c.bf16 %v2142, %v2141
            %v2161 = vpack.c.bf16 %v2144, %v2143
            %v2162 = vpack.c.bf16 %v2146, %v2145
            %v2179 = vunpack.c.l.b16 %v2147
            %v2180 = vunpack.c.h.b16 %v2147
            %v2181 = vunpack.c.l.b16 %v2148
            %v2182 = vunpack.c.h.b16 %v2148
            %v2183 = vunpack.c.l.b16 %v2149
            %v2184 = vunpack.c.h.b16 %v2149
            %v2185 = vunpack.c.l.b16 %v2150
            %v2186 = vunpack.c.h.b16 %v2150
            %v2187 = vunpack.c.l.b16 %v2151
            %v2188 = vunpack.c.h.b16 %v2151
            %v2189 = vunpack.c.l.b16 %v2152
            %v2190 = vunpack.c.h.b16 %v2152
            %v2191 = vunpack.c.l.b16 %v2153
            %v2192 = vunpack.c.h.b16 %v2153
            %v2193 = vunpack.c.l.b16 %v2154
            %v2194 = vunpack.c.h.b16 %v2154
            %v2195 = vunpack.c.l.b16 %v2155
            %v2196 = vunpack.c.h.b16 %v2155
            %v2197 = vunpack.c.l.b16 %v2156
            %v2198 = vunpack.c.h.b16 %v2156
            %v2199 = vunpack.c.l.b16 %v2157
            %v2200 = vunpack.c.h.b16 %v2157
            %v2201 = vunpack.c.l.b16 %v2158
            %v2202 = vunpack.c.h.b16 %v2158
            %v2203 = vunpack.c.l.b16 %v2159
            %v2204 = vunpack.c.h.b16 %v2159
            %v2205 = vunpack.c.l.b16 %v2160
            %v2206 = vunpack.c.h.b16 %v2160
            %v2207 = vunpack.c.l.b16 %v2161
            %v2208 = vunpack.c.h.b16 %v2161
            %v2209 = vunpack.c.l.b16 %v2162
            %v2210 = vunpack.c.h.b16 %v2162
            %v2211 = vpack.c.b16 %v2179, %v2179
            %v2212 = vpack.c.b16 %v2180, %v2180
            %v2213 = vpack.c.b16 %v2181, %v2181
            %v2214 = vpack.c.b16 %v2182, %v2182
            %v2215 = vpack.c.b16 %v2183, %v2183
            %v2216 = vpack.c.b16 %v2184, %v2184
            %v2217 = vpack.c.b16 %v2185, %v2185
            %v2218 = vpack.c.b16 %v2186, %v2186
            %v2219 = vpack.c.b16 %v2187, %v2187
            %v2220 = vpack.c.b16 %v2188, %v2188
            %v2221 = vpack.c.b16 %v2189, %v2189
            %v2222 = vpack.c.b16 %v2190, %v2190
            %v2223 = vpack.c.b16 %v2191, %v2191
            %v2224 = vpack.c.b16 %v2192, %v2192
            %v2225 = vpack.c.b16 %v2193, %v2193
            %v2226 = vpack.c.b16 %v2194, %v2194
            %v2227 = vpack.c.b16 %v2195, %v2195
            %v2228 = vpack.c.b16 %v2196, %v2196
            %v2229 = vpack.c.b16 %v2197, %v2197
            %v2230 = vpack.c.b16 %v2198, %v2198
            %v2231 = vpack.c.b16 %v2199, %v2199
            %v2232 = vpack.c.b16 %v2200, %v2200
            %v2233 = vpack.c.b16 %v2201, %v2201
            %v2234 = vpack.c.b16 %v2202, %v2202
            %v2235 = vpack.c.b16 %v2203, %v2203
            %v2236 = vpack.c.b16 %v2204, %v2204
            %v2237 = vpack.c.b16 %v2205, %v2205
            %v2238 = vpack.c.b16 %v2206, %v2206
            %v2239 = vpack.c.b16 %v2207, %v2207
            %v2240 = vpack.c.b16 %v2208, %v2208
            %v2241 = vpack.c.b16 %v2209, %v2209
            %v2242 = vpack.c.b16 %v2210, %v2210
            %2275 = vst [vmem:[%s406 + $0x4] sm:$0xf] %v2211
            %2276 = vst [vmem:[%s406 + $0xc] sm:$0xf] %v2212
            %2277 = vst [vmem:[%s406 + $0x14] sm:$0xf] %v2213
            %2278 = vst [vmem:[%s406 + $0x1c] sm:$0xf] %v2214
            %2279 = vst [vmem:[%s406 + $0x24] sm:$0xf] %v2215
            %2280 = vst [vmem:[%s406 + $0x2c] sm:$0xf] %v2216
            %2281 = vst [vmem:[%s406 + $0x34] sm:$0xf] %v2217
            %2282 = vst [vmem:[%s406 + $0x3c] sm:$0xf] %v2218
            %2283 = vst [vmem:[%s406 + $0x44] sm:$0xf] %v2219
            %2284 = vst [vmem:[%s406 + $0x4c] sm:$0xf] %v2220
            %2285 = vst [vmem:[%s406 + $0x54] sm:$0xf] %v2221
            %2286 = vst [vmem:[%s406 + $0x5c] sm:$0xf] %v2222
            %2287 = vst [vmem:[%s406 + $0x64] sm:$0xf] %v2223
            %2288 = vst [vmem:[%s406 + $0x6c] sm:$0xf] %v2224
            %2289 = vst [vmem:[%s406 + $0x74] sm:$0xf] %v2225
            %2290 = vst [vmem:[%s406 + $0x7c] sm:$0xf] %v2226
            %2291 = vst [vmem:[%s406 + $0x84] sm:$0xf] %v2227
            %2292 = vst [vmem:[%s406 + $0x8c] sm:$0xf] %v2228
            %2293 = vst [vmem:[%s406 + $0x94] sm:$0xf] %v2229
            %2294 = vst [vmem:[%s406 + $0x9c] sm:$0xf] %v2230
            %2295 = vst [vmem:[%s406 + $0xa4] sm:$0xf] %v2231
            %2296 = vst [vmem:[%s406 + $0xac] sm:$0xf] %v2232
            %2297 = vst [vmem:[%s406 + $0xb4] sm:$0xf] %v2233
            %2298 = vst [vmem:[%s406 + $0xbc] sm:$0xf] %v2234
            %2299 = vst [vmem:[%s406 + $0xc4] sm:$0xf] %v2235
            %2300 = vst [vmem:[%s406 + $0xcc] sm:$0xf] %v2236
            %2301 = vst [vmem:[%s406 + $0xd4] sm:$0xf] %v2237
            %2302 = vst [vmem:[%s406 + $0xdc] sm:$0xf] %v2238
            %2303 = vst [vmem:[%s406 + $0xe4] sm:$0xf] %v2239
            %2304 = vst [vmem:[%s406 + $0xec] sm:$0xf] %v2240
            %2305 = vst [vmem:[%s406 + $0xf4] sm:$0xf] %v2241
            %2306 = vst [vmem:[%s406 + $0xfc] sm:$0xf] %v2242
          $region68: #{tpu_custom_call.1} parent=63 // pred_fallthru
            _
          %p2307 = pneg %p1405
          // Predicated region
          $region69: #{tpu_custom_call.1} parent=63 // pred_check
            _
          $region70: #{tpu_custom_call.1} parent=63 // pred_check_branch
            %2309 = sbr.rel (%p1405) target = $region72
          $region71: #{tpu_custom_call.1} parent=63 // pred_region
            %v2310 = vpack.c.bf16 %v1338, %v1336
            %v2311 = vpack.c.bf16 %v1339, %v1337
            %v2312 = vpack.c.bf16 %v1342, %v1340
            %v2313 = vpack.c.bf16 %v1343, %v1341
            %v2314 = vpack.c.bf16 %v1346, %v1344
            %v2315 = vpack.c.bf16 %v1347, %v1345
            %v2316 = vpack.c.bf16 %v1350, %v1348
            %v2317 = vpack.c.bf16 %v1351, %v1349
            %v2318 = vpack.c.bf16 %v1354, %v1352
            %v2319 = vpack.c.bf16 %v1355, %v1353
            %v2320 = vpack.c.bf16 %v1358, %v1356
            %v2321 = vpack.c.bf16 %v1359, %v1357
            %v2322 = vpack.c.bf16 %v1362, %v1360
            %v2323 = vpack.c.bf16 %v1363, %v1361
            %v2324 = vpack.c.bf16 %v1366, %v1364
            %v2325 = vpack.c.bf16 %v1367, %v1365
            %v2326 = vpack.c.bf16 %v1370, %v1368
            %v2327 = vpack.c.bf16 %v1371, %v1369
            %v2328 = vpack.c.bf16 %v1374, %v1372
            %v2329 = vpack.c.bf16 %v1375, %v1373
            %v2330 = vpack.c.bf16 %v1378, %v1376
            %v2331 = vpack.c.bf16 %v1379, %v1377
            %v2332 = vpack.c.bf16 %v1382, %v1380
            %v2333 = vpack.c.bf16 %v1383, %v1381
            %v2334 = vpack.c.bf16 %v1386, %v1384
            %v2335 = vpack.c.bf16 %v1387, %v1385
            %v2336 = vpack.c.bf16 %v1390, %v1388
            %v2337 = vpack.c.bf16 %v1391, %v1389
            %v2338 = vpack.c.bf16 %v1394, %v1392
            %v2339 = vpack.c.bf16 %v1395, %v1393
            %v2340 = vpack.c.bf16 %v1398, %v1396
            %v2341 = vpack.c.bf16 %v1399, %v1397
            %v2374 = vunpack.c.l.b16 %v2310
            %v2375 = vunpack.c.l.b16 %v2311
            %v2376 = vunpack.c.h.b16 %v2310
            %v2377 = vunpack.c.h.b16 %v2311
            %v2378 = vunpack.c.l.b16 %v2312
            %v2379 = vunpack.c.l.b16 %v2313
            %v2380 = vunpack.c.h.b16 %v2312
            %v2381 = vunpack.c.h.b16 %v2313
            %v2382 = vunpack.c.l.b16 %v2314
            %v2383 = vunpack.c.l.b16 %v2315
            %v2384 = vunpack.c.h.b16 %v2314
            %v2385 = vunpack.c.h.b16 %v2315
            %v2386 = vunpack.c.l.b16 %v2316
            %v2387 = vunpack.c.l.b16 %v2317
            %v2388 = vunpack.c.h.b16 %v2316
            %v2389 = vunpack.c.h.b16 %v2317
            %v2390 = vunpack.c.l.b16 %v2318
            %v2391 = vunpack.c.l.b16 %v2319
            %v2392 = vunpack.c.h.b16 %v2318
            %v2393 = vunpack.c.h.b16 %v2319
            %v2394 = vunpack.c.l.b16 %v2320
            %v2395 = vunpack.c.l.b16 %v2321
            %v2396 = vunpack.c.h.b16 %v2320
            %v2397 = vunpack.c.h.b16 %v2321
            %v2398 = vunpack.c.l.b16 %v2322
            %v2399 = vunpack.c.l.b16 %v2323
            %v2400 = vunpack.c.h.b16 %v2322
            %v2401 = vunpack.c.h.b16 %v2323
            %v2402 = vunpack.c.l.b16 %v2324
            %v2403 = vunpack.c.l.b16 %v2325
            %v2404 = vunpack.c.h.b16 %v2324
            %v2405 = vunpack.c.h.b16 %v2325
            %v2406 = vunpack.c.l.b16 %v2326
            %v2407 = vunpack.c.l.b16 %v2327
            %v2408 = vunpack.c.h.b16 %v2326
            %v2409 = vunpack.c.h.b16 %v2327
            %v2410 = vunpack.c.l.b16 %v2328
            %v2411 = vunpack.c.l.b16 %v2329
            %v2412 = vunpack.c.h.b16 %v2328
            %v2413 = vunpack.c.h.b16 %v2329
            %v2414 = vunpack.c.l.b16 %v2330
            %v2415 = vunpack.c.l.b16 %v2331
            %v2416 = vunpack.c.h.b16 %v2330
            %v2417 = vunpack.c.h.b16 %v2331
            %v2418 = vunpack.c.l.b16 %v2332
            %v2419 = vunpack.c.l.b16 %v2333
            %v2420 = vunpack.c.h.b16 %v2332
            %v2421 = vunpack.c.h.b16 %v2333
            %v2422 = vunpack.c.l.b16 %v2334
            %v2423 = vunpack.c.l.b16 %v2335
            %v2424 = vunpack.c.h.b16 %v2334
            %v2425 = vunpack.c.h.b16 %v2335
            %v2426 = vunpack.c.l.b16 %v2336
            %v2427 = vunpack.c.l.b16 %v2337
            %v2428 = vunpack.c.h.b16 %v2336
            %v2429 = vunpack.c.h.b16 %v2337
            %v2430 = vunpack.c.l.b16 %v2338
            %v2431 = vunpack.c.l.b16 %v2339
            %v2432 = vunpack.c.h.b16 %v2338
            %v2433 = vunpack.c.h.b16 %v2339
            %v2434 = vunpack.c.l.b16 %v2340
            %v2435 = vunpack.c.l.b16 %v2341
            %v2436 = vunpack.c.h.b16 %v2340
            %v2437 = vunpack.c.h.b16 %v2341
            %v2438 = vpack.c.b16 %v2375, %v2374
            %v2439 = vpack.c.b16 %v2377, %v2376
            %v2440 = vpack.c.b16 %v2379, %v2378
            %v2441 = vpack.c.b16 %v2381, %v2380
            %v2442 = vpack.c.b16 %v2383, %v2382
            %v2443 = vpack.c.b16 %v2385, %v2384
            %v2444 = vpack.c.b16 %v2387, %v2386
            %v2445 = vpack.c.b16 %v2389, %v2388
            %v2446 = vpack.c.b16 %v2391, %v2390
            %v2447 = vpack.c.b16 %v2393, %v2392
            %v2448 = vpack.c.b16 %v2395, %v2394
            %v2449 = vpack.c.b16 %v2397, %v2396
            %v2450 = vpack.c.b16 %v2399, %v2398
            %v2451 = vpack.c.b16 %v2401, %v2400
            %v2452 = vpack.c.b16 %v2403, %v2402
            %v2453 = vpack.c.b16 %v2405, %v2404
            %v2454 = vpack.c.b16 %v2407, %v2406
            %v2455 = vpack.c.b16 %v2409, %v2408
            %v2456 = vpack.c.b16 %v2411, %v2410
            %v2457 = vpack.c.b16 %v2413, %v2412
            %v2458 = vpack.c.b16 %v2415, %v2414
            %v2459 = vpack.c.b16 %v2417, %v2416
            %v2460 = vpack.c.b16 %v2419, %v2418
            %v2461 = vpack.c.b16 %v2421, %v2420
            %v2462 = vpack.c.b16 %v2423, %v2422
            %v2463 = vpack.c.b16 %v2425, %v2424
            %v2464 = vpack.c.b16 %v2427, %v2426
            %v2465 = vpack.c.b16 %v2429, %v2428
            %v2466 = vpack.c.b16 %v2431, %v2430
            %v2467 = vpack.c.b16 %v2433, %v2432
            %v2468 = vpack.c.b16 %v2435, %v2434
            %v2469 = vpack.c.b16 %v2437, %v2436
            %2502 = vst [vmem:[%s406] sm:$0xff] %v2438
            %2503 = vst [vmem:[%s406 + $0x8] sm:$0xff] %v2439
            %2504 = vst [vmem:[%s406 + $0x10] sm:$0xff] %v2440
            %2505 = vst [vmem:[%s406 + $0x18] sm:$0xff] %v2441
            %2506 = vst [vmem:[%s406 + $0x20] sm:$0xff] %v2442
            %2507 = vst [vmem:[%s406 + $0x28] sm:$0xff] %v2443
            %2508 = vst [vmem:[%s406 + $0x30] sm:$0xff] %v2444
            %2509 = vst [vmem:[%s406 + $0x38] sm:$0xff] %v2445
            %2510 = vst [vmem:[%s406 + $0x40] sm:$0xff] %v2446
            %2511 = vst [vmem:[%s406 + $0x48] sm:$0xff] %v2447
            %2512 = vst [vmem:[%s406 + $0x50] sm:$0xff] %v2448
            %2513 = vst [vmem:[%s406 + $0x58] sm:$0xff] %v2449
            %2514 = vst [vmem:[%s406 + $0x60] sm:$0xff] %v2450
            %2515 = vst [vmem:[%s406 + $0x68] sm:$0xff] %v2451
            %2516 = vst [vmem:[%s406 + $0x70] sm:$0xff] %v2452
            %2517 = vst [vmem:[%s406 + $0x78] sm:$0xff] %v2453
            %2518 = vst [vmem:[%s406 + $0x80] sm:$0xff] %v2454
            %2519 = vst [vmem:[%s406 + $0x88] sm:$0xff] %v2455
            %2520 = vst [vmem:[%s406 + $0x90] sm:$0xff] %v2456
            %2521 = vst [vmem:[%s406 + $0x98] sm:$0xff] %v2457
            %2522 = vst [vmem:[%s406 + $0xa0] sm:$0xff] %v2458
            %2523 = vst [vmem:[%s406 + $0xa8] sm:$0xff] %v2459
            %2524 = vst [vmem:[%s406 + $0xb0] sm:$0xff] %v2460
            %2525 = vst [vmem:[%s406 + $0xb8] sm:$0xff] %v2461
            %2526 = vst [vmem:[%s406 + $0xc0] sm:$0xff] %v2462
            %2527 = vst [vmem:[%s406 + $0xc8] sm:$0xff] %v2463
            %2528 = vst [vmem:[%s406 + $0xd0] sm:$0xff] %v2464
            %2529 = vst [vmem:[%s406 + $0xd8] sm:$0xff] %v2465
            %2530 = vst [vmem:[%s406 + $0xe0] sm:$0xff] %v2466
            %2531 = vst [vmem:[%s406 + $0xe8] sm:$0xff] %v2467
            %2532 = vst [vmem:[%s406 + $0xf0] sm:$0xff] %v2468
            %2533 = vst [vmem:[%s406 + $0xf8] sm:$0xff] %v2469
          $region72: #{tpu_custom_call.1} parent=63 // pred_fallthru
            _
        $region64: #{tpu_custom_call.1} parent=39 // pred_fallthru
          _
        %s2534 = sand.u32 %s191, 1
        %s2535 = scalar_lea.sflag [#allocation5], %s2534
        %s2536 = sand.u32 %s191, 1
        %s2537 = smul.addr %s2536, 256
        %s2538 = scalar_lea.vmem [#allocation11], %s2537
        // Predicated region
        $region73: #{tpu_custom_call.1} parent=39 // pred_check
          %p2539 = pneg %p201
        $region74: #{tpu_custom_call.1} parent=39 // pred_check_branch
          %2541 = sbr.rel (%p2539) target = $region76
        $region75: #{tpu_custom_call.1} parent=39 // pred_region
          %s2542 = smul.u32 32, %s33
          %s2543 = smul.u32 2, %s34
          %s2545 = ssub.s32 4096, 4096
          %2546 = vsyncadd %s2535, %s2545
          %s2547 = smul.addr %s2542, 6
          %s2548 = sadd.s32 %s2543, %s2547
          %s2549 = smul.addr %s2548, 64
          %s2550 = scalar_lea.hbm %s5, %s2549
          %s2551 = sshll.u32 %s2538, 4
          %s2552 = int_to_ptr.vmem [resolvable:$true] %s2551
          %2557 = dma.vmem_to_hbm [thread:$0]  %s2552, 4096, %s2550, %s2535, 128, 384, 8
        $region76: #{tpu_custom_call.1} parent=39 // pred_fallthru
          _
      $region40: #{tpu_custom_call.1} parent=5 // pred_fallthru
        _
      %p2558 = scmp.le.s32.totalorder 2, %s23
      // Predicated region
      $region77: #{tpu_custom_call.1} parent=5 // pred_check
        %p2559 = pneg %p2558
      $region78: #{tpu_custom_call.1} parent=5 // pred_check_branch
        %2561 = sbr.rel (%p2559) target = $region80
      $region79: #{tpu_custom_call.1} parent=5 // pred_region
        %s2562 = ssub.s32 %s23, 2
        // Predicated region
        $region81: #{tpu_custom_call.1} parent=79 // pred_check
          %p2563 = pneg %p207
        $region82: #{tpu_custom_call.1} parent=79 // pred_check_branch
          %2565 = sbr.rel (%p2563) target = $region84
        $region83: #{tpu_custom_call.1} parent=79 // pred_region
          %s2566 = sand.u32 %s192, 1
          %s2567 = scalar_lea.sflag [#allocation5], %s2566
          %s2568 = sand.u32 %s192, 1
          %s2569 = smul.addr %s2568, 256
          %s2570 = scalar_lea.vmem [#allocation11], %s2569
          %2571 = dma.done %s2567, 4096
        $region84: #{tpu_custom_call.1} parent=79 // pred_fallthru
          _
      $region80: #{tpu_custom_call.1} parent=5 // pred_fallthru
        _
    $region6: #{tpu_custom_call.1} parent=1 // loop_footer
      %s27 = sadd.s32 1, %s23
    $region7: #{tpu_custom_call.1} parent=1 // loop_footer_branch
      %22 = sbr.rel target = $region3
    $region8: #{tpu_custom_call.1} parent=1 // loop_exit
      _
    %2572 = vsyncpa [#allocation4], 1
    %s2573 = scalar_lea.sflag [#allocation4], 1
    %2574 = vsyncpa %s2573, 1
    %2575 = vsyncpa [#allocation7], 1
    %s2576 = scalar_lea.sflag [#allocation7], 1
    %2577 = vsyncpa %s2576, 1
    %2578 = vsyncpa [#allocation10], 1
    %s2579 = scalar_lea.sflag [#allocation10], 1
    %2580 = vsyncpa %s2579, 1
    %2581 = vsyncpa [#allocation5], 1
    %s2582 = scalar_lea.sflag [#allocation5], 1
    %2583 = vsyncpa %s2582, 1

</llo_original>
